<compile_context>
chip_gen: v6e
topology: v6e:2x2x1
jax: 0.10.0
libtpu: 0.0.40
codegen_flags: <defaults>
</compile_context>

<pallas_src>
import functools
import numpy as np
import jax
import jax.numpy as jnp
from jax.experimental import pallas as pl
from jax.experimental.pallas import tpu as pltpu

LEAKY_SLOPE = 0.01   # nn.LeakyReLU() default
BN_EPS = 1e-5        # nn.BatchNorm2d default
LANE = 128

_VMEM_SPEC = pl.BlockSpec(memory_space=pltpu.MemorySpace.VMEM)


def _round_up(x, m):
    return ((x + m - 1) // m) * m


@functools.lru_cache(maxsize=1)
def _vmem_capacity_bytes():
    try:
        return int(pltpu.get_tpu_info().vmem_capacity_bytes)
    except Exception:
        return 128 * 1024 * 1024


def _tiling_budget():
    cap = _vmem_capacity_bytes()
    vmem_limit = int(cap * 3 // 4)                        # headroom below physical
    target_rows = 2048 if cap >= (96 << 20) else 1024     # v5e/v6e vs v7x (64 MiB)
    return target_rows, vmem_limit


# ----------------------------------------------------------------------------
# Pallas kernels
# ----------------------------------------------------------------------------
def _conv_stats_kernel(xt_ref, w9_ref, y_ref, ps_ref):
    """Row tile of Conv2d(3x3, s=2, p=1) as a single K=9*Cin MXU matmul.

    xt_ref: (tm, 9*Cin) bf16  im2col taps for tm output pixels.
    w9_ref: (9*Cin, Cp) bf16  conv weight, Cout zero-padded to Cp (multiple of 128).
    y_ref:  (tm, Cp)    bf16  raw (pre-BatchNorm) conv output tile.
    ps_ref: (1, 2, Cp)  f32   per-tile per-channel [sum, sum-of-squares].
    """
    acc = jnp.dot(xt_ref[...], w9_ref[...], preferred_element_type=jnp.float32)
    yb = acc.astype(y_ref.dtype)
    y_ref[...] = yb
    # Stats on the XLU (MXU stays on the conv).  Computed from the bf16-rounded
    # values so the downstream BN-apply sees exactly matching statistics.
    # Zero-padded rows contribute 0 (bias-free conv) -> no mask required.
    yf = yb.astype(jnp.float32)
    ps_ref[0] = jnp.concatenate(
        [jnp.sum(yf, axis=0, keepdims=True),
         jnp.sum(yf * yf, axis=0, keepdims=True)], axis=0)


def _make_final_kernel(inv_r):
    """Fused last Conv + BatchNorm(batch stats) + LeakyReLU + MaxPool2d(2) + Linear."""

    def kernel(xt_ref, w9_ref, gb_ref, wl_ref, bl_ref, o_ref):
        # xt_ref: (4, Np, 9*Cin) bf16  taps for the 4 pixels of the 2x2 map.
        # w9_ref: (9*Cin, Cp)    bf16.  gb_ref: (2, Cp) f32 [gamma, beta].
        # wl_ref: (Cp, Cp)       bf16  (Linear weight, transposed + padded).
        # bl_ref: (1, Cp)        f32.   o_ref: (Np, Cp) f32.
        accs = [jnp.dot(xt_ref[p], w9_ref[...],
                        preferred_element_type=jnp.float32) for p in range(4)]
        sums = [jnp.sum(a, axis=0, keepdims=True) for a in accs]
        sqs = [jnp.sum(a * a, axis=0, keepdims=True) for a in accs]
        s = sums[0] + sums[1] + sums[2] + sums[3]
        ss = sqs[0] + sqs[1] + sqs[2] + sqs[3]
        mean = s * inv_r
        var = jnp.maximum(ss * inv_r - mean * mean, 0.0)
        gb = gb_ref[...]
        scale = gb[0:1, :] * jax.lax.rsqrt(var + BN_EPS)
        shift = gb[1:2, :] - mean * scale
        vs = []
        for a in accs:
            v = a * scale + shift
            vs.append(jnp.where(v >= 0, v, LEAKY_SLOPE * v))
        pooled = jnp.maximum(jnp.maximum(vs[0], vs[1]),
                             jnp.maximum(vs[2], vs[3]))                 # (Np, Cp)
        o_ref[...] = (jnp.dot(pooled.astype(wl_ref.dtype), wl_ref[...],
                              preferred_element_type=jnp.float32) + bl_ref[...])

    return kernel


# ----------------------------------------------------------------------------
# Host-side layout prep & wrappers
# ----------------------------------------------------------------------------
def _im2col_s2(a):
    """Stride-2 3x3 im2col.  a: (N, H, W, C) bf16 -> (N*Ho*Wo, 9*C) bf16."""
    n, h, w, c = a.shape
    assert h % 2 == 0 and w % 2 == 0
    ho, wo = h // 2, w // 2
    ap = jnp.pad(a, ((0, 0), (1, 1), (1, 1), (0, 0)))
    taps = [ap[:, kh:kh + 2 * ho:2, kw:kw + 2 * wo:2, :]
            for kh in range(3) for kw in range(3)]          # each (N, Ho, Wo, C)
    xt = jnp.stack(taps, axis=3).reshape(n * ho * wo, 9 * c)
    return xt, ho, wo


def _prep_conv_w9(w_conv, c_pad):
    """torch (Cout, Cin, 3, 3) -> (9*Cin, Cout zero-padded to c_pad), bf16."""
    cout, cin = w_conv.shape[0], w_conv.shape[1]
    w9 = jnp.transpose(w_conv, (2, 3, 1, 0)).reshape(9 * cin, cout)
    if c_pad != cout:
        w9 = jnp.pad(w9, ((0, 0), (0, c_pad - cout)))
    return w9.astype(jnp.bfloat16)


def _choose_tiling(m, target_rows):
    """(tile_rows, padded_rows): tile is a multiple of 8; prefer >=2 grid blocks."""
    m8 = _round_up(m, 8)
    if m8 <= target_rows:
        half = _round_up((m + 1) // 2, 8)
        if half >= 64 and 2 * half >= m8:
            return half, 2 * half          # two blocks -> both TCs on v7x megacore
        return m8, m8
    tm = target_rows - (target_rows % 8)
    return tm, _round_up(m, tm)


def _conv_bn_stats(a_nhwc, w_conv, target_rows, vmem_limit):
    """Bias-free Conv2d(3x3, s=2, p=1) + per-channel batch statistics.

    Returns the raw conv output in flat (M_pad, Cout_pad) bf16 layout plus the
    (sum, sum_sq) over all real output pixels, and (ho, wo, m).
    """
    n = a_nhwc.shape[0]
    cout = w_conv.shape[0]
    c_pad = _round_up(cout, LANE)

    xt, ho, wo = _im2col_s2(a_nhwc)
    m = n * ho * wo
    k = xt.shape[1]
    tm, m_pad = _choose_tiling(m, target_rows)
    if m_pad != m:
        xt = jnp.pad(xt, ((0, m_pad - m), (0, 0)))
    n_blocks = m_pad // tm

    w9 = _prep_conv_w9(w_conv, c_pad)

    y, ps = pl.pallas_call(
        _conv_stats_kernel,
        grid=(n_blocks,),
        in_specs=[
            pl.BlockSpec((tm, k), lambda i: (i, 0)),
            pl.BlockSpec((k, c_pad), lambda i: (0, 0)),      # VMEM-resident weight
        ],
        out_specs=(
            pl.BlockSpec((tm, c_pad), lambda i: (i, 0)),     # lane-dense output
            pl.BlockSpec((1, 2, c_pad), lambda i: (i, 0, 0)),
        ),
        out_shape=(
            jax.ShapeDtypeStruct((m_pad, c_pad), jnp.bfloat16),
            jax.ShapeDtypeStruct((n_blocks, 2, c_pad), jnp.float32),
        ),
        compiler_params=pltpu.CompilerParams(
            dimension_semantics=("parallel",),
            vmem_limit_bytes=vmem_limit),
    )(xt, w9)

    sums = jnp.sum(ps, axis=0)                               # (2, c_pad)
    return y, sums, (ho, wo, m)


def _bn_scale_shift(sums, gamma, beta, count):
    cout = gamma.shape[0]
    mean = sums[0, :cout] / count
    var = jnp.maximum(sums[1, :cout] / count - mean * mean, 0.0)  # biased variance
    scale = gamma * jax.lax.rsqrt(var + BN_EPS)
    shift = beta - mean * scale
    return scale, shift


def _bn_lrelu_nhwc(y_flat, scale, shift, n, ho, wo, cout):
    """BN apply (precomputed scale/shift) + LeakyReLU while reshaping the flat
    conv output back to NHWC.  Plain jnp: XLA fuses it into the next layer's
    im2col gather, so no separate HBM round trip of the normalized activation."""
    a = y_flat[:n * ho * wo, :cout].astype(jnp.float32).reshape(n, ho, wo, cout)
    a = a * scale + shift
    return jnp.where(a >= 0, a, LEAKY_SLOPE * a).astype(jnp.bfloat16)


def gradual_style_block_forward(x_nchw, params):
    """Full GradualStyleBlock.forward.  x_nchw: (N, C_in, S, S) float32."""
    convs = params["convs"]
    n_layers = len(convs)
    target_rows, vmem_limit = _tiling_budget()

    n = x_nchw.shape[0]
    a = jnp.transpose(x_nchw, (0, 2, 3, 1)).astype(jnp.bfloat16)    # NHWC bf16

    for li, (w_conv, _b, gamma, beta) in enumerate(convs):
        # NOTE: the conv bias `_b` is intentionally not added: training-mode
        # (batch-statistic) BatchNorm's mean subtraction cancels a per-channel
        # bias exactly.
        # TODO(synk): add the bias back if eval-mode running-stat BN is needed.
        cout = w_conv.shape[0]
        c_pad = _round_up(cout, LANE)
        last = (li == n_layers - 1)

        if not last:
            y, sums, (ho, wo, m) = _conv_bn_stats(a, w_conv, target_rows, vmem_limit)
            scale, shift = _bn_scale_shift(sums, gamma, beta, float(m))
            a = _bn_lrelu_nhwc(y, scale, shift, n, ho, wo, cout)
        else:
            # Last block: conv + BN + LeakyReLU + MaxPool2d(2) + Linear, fused.
            assert a.shape[1] == 4 and a.shape[2] == 4, \
                "module structure implies a 2x2 map before MaxPool2d(2)"
            cin = a.shape[3]
            xt, ho, wo = _im2col_s2(a)                       # (N*4, 9*cin)
            n_pad = _round_up(n, 8)
            xt4 = jnp.transpose(xt.reshape(n, 4, 9 * cin), (1, 0, 2))
            if n_pad != n:
                xt4 = jnp.pad(xt4, ((0, 0), (0, n_pad - n), (0, 0)))
            w9 = _prep_conv_w9(w_conv, c_pad)
            gb = jnp.stack([jnp.pad(gamma, (0, c_pad - cout)),
                            jnp.pad(beta, (0, c_pad - cout))], axis=0)
            wl = jnp.pad(jnp.transpose(params["linear_w"]),
                         ((0, c_pad - cout), (0, c_pad - cout))).astype(jnp.bfloat16)
            bl = jnp.pad(params["linear_b"], (0, c_pad - cout)).reshape(1, c_pad)
            out = pl.pallas_call(
                _make_final_kernel(1.0 / float(n * 4)),
                out_shape=jax.ShapeDtypeStruct((n_pad, c_pad), jnp.float32),
                in_specs=[_VMEM_SPEC] * 5,
                out_specs=_VMEM_SPEC,
            )(xt4, w9, gb.astype(jnp.float32), wl, bl.astype(jnp.float32))
            return out[:n, :cout]                            # slice padding once
    raise AssertionError("empty conv stack")


# ----------------------------------------------------------------------------
# Deterministic parameter initialization (synthetic, no checkpoint)
# ----------------------------------------------------------------------------
def init_params(key, in_channels, out_channels, resolution):
    assert in_channels == out_channels, \
        "reference module only runs with in_channels == out_channels"
    n_blocks = int(np.log2(resolution))
    keys = jax.random.split(key, 4 * n_blocks + 2)
    convs = []
    for i in range(n_blocks):
        kw_, kb_, kg_, kbeta_ = keys[4 * i:4 * i + 4]
        w = 0.05 * jax.random.normal(kw_, (out_channels, in_channels, 3, 3),
                                     jnp.float32)
        b = 0.05 * jax.random.normal(kb_, (out_channels,), jnp.float32)
        gamma = 1.0 + 0.1 * jax.random.normal(kg_, (out_channels,), jnp.float32)
        beta = 0.1 * jax.random.normal(kbeta_, (out_channels,), jnp.float32)
        convs.append((w, b, gamma, beta))
    w_lin = 0.1 * jax.random.normal(keys[-2], (out_channels, out_channels),
                                    jnp.float32)
    b_lin = 0.1 * jax.random.normal(keys[-1], (out_channels,), jnp.float32)
    return {"convs": convs, "linear_w": w_lin, "linear_b": b_lin}


# ----------------------------------------------------------------------------
# Pure-JAX f32 reference (numerical sanity check; keeps the conv bias)
# ----------------------------------------------------------------------------
def reference_forward(x_nchw, params):
    x = jnp.transpose(x_nchw, (0, 2, 3, 1))
    for (w, b, gamma, beta) in params["convs"]:
        w_hwio = jnp.transpose(w, (2, 3, 1, 0))
        y = jax.lax.conv_general_dilated(
            x, w_hwio, window_strides=(2, 2), padding=((1, 1), (1, 1)),
            dimension_numbers=("NHWC", "HWIO", "NHWC"))
        y = y + b
        mean = jnp.mean(y, axis=(0, 1, 2), keepdims=True)
        var = jnp.mean(jnp.square(y - mean), axis=(0, 1, 2), keepdims=True)
        y = (y - mean) * jax.lax.rsqrt(var + BN_EPS) * gamma + beta
        x = jnp.where(y >= 0, y, LEAKY_SLOPE * y)
    n, h, wd, c = x.shape
    x = x.reshape(n, h // 2, 2, wd // 2, 2, c).max(axis=(2, 4))
    x = x.reshape(n, -1)
    return x @ params["linear_w"].T + params["linear_b"]


# ----------------------------------------------------------------------------
if __name__ == "__main__":
    batch = 2
    in_channels = out_channels = 32
    resolution = 8                 # -> int(log2(8)) = 3 conv blocks
    spatial = 2 * resolution       # 16x16 input => 2x2 map before MaxPool2d(2)

    key = jax.random.PRNGKey(0)
    kx, kp = jax.random.split(key)
    x = jax.random.normal(kx, (batch, in_channels, spatial, spatial), jnp.float32)
    params = init_params(kp, in_channels, out_channels, resolution)

    fwd = jax.jit(gradual_style_block_forward)
    out = jax.block_until_ready(fwd(x, params))
    ref = jax.block_until_ready(reference_forward(x, params))
    assert out.shape == (batch, out_channels)
    # bf16 MXU inputs in the kernel path vs an f32 reference -> loose tolerance
    np.testing.assert_allclose(np.asarray(out), np.asarray(ref),
                               rtol=5e-2, atol=5e-2)

    print("KERNEL_OK")
</pallas_src>

<mosaic_0001>
module attributes {stable_mosaic.version = 11 : i64} {
  func.func @_conv_stats_kernel(%arg0: i32, %arg1: memref<64x288xbf16, #tpu.memory_space<vmem>>, %arg2: memref<288x128xbf16, #tpu.memory_space<vmem>>, %arg3: memref<64x128xbf16, #tpu.memory_space<vmem>>, %arg4: memref<1x2x128xf32, #tpu.memory_space<vmem>>) attributes {dimension_semantics = [#tpu.dimension_semantics<parallel>], iteration_bounds = array<i64: 2>, scalar_prefetch = 0 : i64, scratch_operands = 0 : i64, tpu.core_type = #tpu.core_type<tc>, window_params = [{transform_indices = @transform_0, window_bounds = array<i64: 64, 288>}, {pipeline_mode = #tpu.pipeline_mode<synchronous>, transform_indices = @transform_1, window_bounds = array<i64: 288, 128>}, {transform_indices = @transform_2, window_bounds = array<i64: 64, 128>}, {transform_indices = @transform_3, window_bounds = array<i64: 1, 2, 128>}]} {
    %c0 = arith.constant 0 : index
    %c0_0 = arith.constant 0 : index
    %0 = vector.load %arg1[%c0, %c0_0] : memref<64x288xbf16, #tpu.memory_space<vmem>>, vector<64x288xbf16>
    %c0_1 = arith.constant 0 : index
    %c0_2 = arith.constant 0 : index
    %1 = vector.load %arg2[%c0_1, %c0_2] : memref<288x128xbf16, #tpu.memory_space<vmem>>, vector<288x128xbf16>
    %cst = arith.constant dense<0.000000e+00> : vector<64x128xf32>
    %2 = tpu.matmul %0, %1, %cst {dimension_numbers = #tpu.dot_dimension_numbers<[1], [0], [0], [1], [0, 0, 1, 1], [], []>} : vector<64x288xbf16>, vector<288x128xbf16>, vector<64x128xf32> -> vector<64x128xf32>
    %3 = arith.truncf %2 : vector<64x128xf32> to vector<64x128xbf16>
    %c0_3 = arith.constant 0 : index
    %c0_4 = arith.constant 0 : index
    %4 = vector.load %arg3[%c0_3, %c0_4] : memref<64x128xbf16, #tpu.memory_space<vmem>>, vector<64x128xbf16>
    tpu.vector_store %arg3[%c0_3, %c0_4], %3 {strides = array<i32>} : memref<64x128xbf16, #tpu.memory_space<vmem>>, vector<64x128xbf16>,
    %5 = arith.extf %3 : vector<64x128xbf16> to vector<64x128xf32>
    %cst_5 = arith.constant dense<0.000000e+00> : vector<128xf32>
    %6 = vector.multi_reduction <add>, %5, %cst_5 [0] : vector<64x128xf32> to vector<128xf32>
    %7 = vector.shape_cast %6 : vector<128xf32> to vector<1x128xf32>
    %8 = arith.mulf %5, %5 : vector<64x128xf32>
    %cst_6 = arith.constant dense<0.000000e+00> : vector<128xf32>
    %9 = vector.multi_reduction <add>, %8, %cst_6 [0] : vector<64x128xf32> to vector<128xf32>
    %10 = vector.shape_cast %9 : vector<128xf32> to vector<1x128xf32>
    %11 = tpu.concatenate %7, %10 in 0 : vector<1x128xf32>, vector<1x128xf32> -> vector<2x128xf32>
    %c0_7 = arith.constant 0 : index
    %c0_8 = arith.constant 0 : index
    %c0_9 = arith.constant 0 : index
    %12 = vector.load %arg4[%c0_7, %c0_8, %c0_9] : memref<1x2x128xf32, #tpu.memory_space<vmem>>, vector<1x2x128xf32>
    %13 = vector.shape_cast %12 : vector<1x2x128xf32> to vector<2x128xf32>
    %14 = vector.shape_cast %11 : vector<2x128xf32> to vector<1x2x128xf32>
    tpu.vector_store %arg4[%c0_7, %c0_8, %c0_9], %14 {strides = array<i32>} : memref<1x2x128xf32, #tpu.memory_space<vmem>>, vector<1x2x128xf32>,
    return
  }
  func.func @transform_0(%arg0: i32) -> (i32, i32) {
    %c0_i32 = arith.constant 0 : i32
    %c0_i32_0 = arith.constant 0 : i32
    return %arg0, %c0_i32 : i32, i32
  }
  func.func @transform_1(%arg0: i32) -> (i32, i32) {
    %c0_i32 = arith.constant 0 : i32
    %c0_i32_0 = arith.constant 0 : i32
    %c0_i32_1 = arith.constant 0 : i32
    return %c0_i32, %c0_i32_0 : i32, i32
  }
  func.func @transform_2(%arg0: i32) -> (i32, i32) {
    %c0_i32 = arith.constant 0 : i32
    %c0_i32_0 = arith.constant 0 : i32
    return %arg0, %c0_i32 : i32, i32
  }
  func.func @transform_3(%arg0: i32) -> (i32, i32, i32) {
    %c0_i32 = arith.constant 0 : i32
    %c0_i32_0 = arith.constant 0 : i32
    %c0_i32_1 = arith.constant 0 : i32
    return %arg0, %c0_i32, %c0_i32_0 : i32, i32, i32
  }
}

module attributes {stable_mosaic.version = 11 : i64} {
  func.func @_conv_stats_kernel(%arg0: i32, %arg1: memref<32x288xbf16, #tpu.memory_space<vmem>>, %arg2: memref<288x128xbf16, #tpu.memory_space<vmem>>, %arg3: memref<32x128xbf16, #tpu.memory_space<vmem>>, %arg4: memref<1x2x128xf32, #tpu.memory_space<vmem>>) attributes {dimension_semantics = [#tpu.dimension_semantics<parallel>], iteration_bounds = array<i64: 1>, scalar_prefetch = 0 : i64, scratch_operands = 0 : i64, tpu.core_type = #tpu.core_type<tc>, window_params = [{transform_indices = @transform_0, window_bounds = array<i64: 32, 288>}, {pipeline_mode = #tpu.pipeline_mode<synchronous>, transform_indices = @transform_1, window_bounds = array<i64: 288, 128>}, {transform_indices = @transform_2, window_bounds = array<i64: 32, 128>}, {transform_indices = @transform_3, window_bounds = array<i64: 1, 2, 128>}]} {
    %c0 = arith.constant 0 : index
    %c0_0 = arith.constant 0 : index
    %0 = vector.load %arg1[%c0, %c0_0] : memref<32x288xbf16, #tpu.memory_space<vmem>>, vector<32x288xbf16>
    %c0_1 = arith.constant 0 : index
    %c0_2 = arith.constant 0 : index
    %1 = vector.load %arg2[%c0_1, %c0_2] : memref<288x128xbf16, #tpu.memory_space<vmem>>, vector<288x128xbf16>
    %cst = arith.constant dense<0.000000e+00> : vector<32x128xf32>
    %2 = tpu.matmul %0, %1, %cst {dimension_numbers = #tpu.dot_dimension_numbers<[1], [0], [0], [1], [0, 0, 1, 1], [], []>} : vector<32x288xbf16>, vector<288x128xbf16>, vector<32x128xf32> -> vector<32x128xf32>
    %3 = arith.truncf %2 : vector<32x128xf32> to vector<32x128xbf16>
    %c0_3 = arith.constant 0 : index
    %c0_4 = arith.constant 0 : index
    %4 = vector.load %arg3[%c0_3, %c0_4] : memref<32x128xbf16, #tpu.memory_space<vmem>>, vector<32x128xbf16>
    tpu.vector_store %arg3[%c0_3, %c0_4], %3 {strides = array<i32>} : memref<32x128xbf16, #tpu.memory_space<vmem>>, vector<32x128xbf16>,
    %5 = arith.extf %3 : vector<32x128xbf16> to vector<32x128xf32>
    %cst_5 = arith.constant dense<0.000000e+00> : vector<128xf32>
    %6 = vector.multi_reduction <add>, %5, %cst_5 [0] : vector<32x128xf32> to vector<128xf32>
    %7 = vector.shape_cast %6 : vector<128xf32> to vector<1x128xf32>
    %8 = arith.mulf %5, %5 : vector<32x128xf32>
    %cst_6 = arith.constant dense<0.000000e+00> : vector<128xf32>
    %9 = vector.multi_reduction <add>, %8, %cst_6 [0] : vector<32x128xf32> to vector<128xf32>
    %10 = vector.shape_cast %9 : vector<128xf32> to vector<1x128xf32>
    %11 = tpu.concatenate %7, %10 in 0 : vector<1x128xf32>, vector<1x128xf32> -> vector<2x128xf32>
    %c0_7 = arith.constant 0 : index
    %c0_8 = arith.constant 0 : index
    %c0_9 = arith.constant 0 : index
    %12 = vector.load %arg4[%c0_7, %c0_8, %c0_9] : memref<1x2x128xf32, #tpu.memory_space<vmem>>, vector<1x2x128xf32>
    %13 = vector.shape_cast %12 : vector<1x2x128xf32> to vector<2x128xf32>
    %14 = vector.shape_cast %11 : vector<2x128xf32> to vector<1x2x128xf32>
    tpu.vector_store %arg4[%c0_7, %c0_8, %c0_9], %14 {strides = array<i32>} : memref<1x2x128xf32, #tpu.memory_space<vmem>>, vector<1x2x128xf32>,
    return
  }
  func.func @transform_0(%arg0: i32) -> (i32, i32) {
    %c0_i32 = arith.constant 0 : i32
    %c0_i32_0 = arith.constant 0 : i32
    return %arg0, %c0_i32 : i32, i32
  }
  func.func @transform_1(%arg0: i32) -> (i32, i32) {
    %c0_i32 = arith.constant 0 : i32
    %c0_i32_0 = arith.constant 0 : i32
    %c0_i32_1 = arith.constant 0 : i32
    return %c0_i32, %c0_i32_0 : i32, i32
  }
  func.func @transform_2(%arg0: i32) -> (i32, i32) {
    %c0_i32 = arith.constant 0 : i32
    %c0_i32_0 = arith.constant 0 : i32
    return %arg0, %c0_i32 : i32, i32
  }
  func.func @transform_3(%arg0: i32) -> (i32, i32, i32) {
    %c0_i32 = arith.constant 0 : i32
    %c0_i32_0 = arith.constant 0 : i32
    %c0_i32_1 = arith.constant 0 : i32
    return %arg0, %c0_i32, %c0_i32_0 : i32, i32, i32
  }
}

module attributes {stable_mosaic.version = 11 : i64} {
  func.func @kernel(%arg0: memref<4x8x288xbf16, #tpu.memory_space<vmem>>, %arg1: memref<288x128xbf16, #tpu.memory_space<vmem>>, %arg2: memref<2x128xf32, #tpu.memory_space<vmem>>, %arg3: memref<128x128xbf16, #tpu.memory_space<vmem>>, %arg4: memref<1x128xf32, #tpu.memory_space<vmem>>, %arg5: memref<8x128xf32, #tpu.memory_space<vmem>>) attributes {dimension_semantics = [], scalar_prefetch = 0 : i64, scratch_operands = 0 : i64, tpu.core_type = #tpu.core_type<tc>} {
    %c0 = arith.constant 0 : index
    %c0_0 = arith.constant 0 : index
    %c0_1 = arith.constant 0 : index
    %0 = vector.load %arg0[%c0, %c0_0, %c0_1] : memref<4x8x288xbf16, #tpu.memory_space<vmem>>, vector<1x8x288xbf16>
    %1 = vector.shape_cast %0 : vector<1x8x288xbf16> to vector<8x288xbf16>
    %c0_2 = arith.constant 0 : index
    %c0_3 = arith.constant 0 : index
    %2 = vector.load %arg1[%c0_2, %c0_3] : memref<288x128xbf16, #tpu.memory_space<vmem>>, vector<288x128xbf16>
    %cst = arith.constant dense<0.000000e+00> : vector<8x128xf32>
    %3 = tpu.matmul %1, %2, %cst {dimension_numbers = #tpu.dot_dimension_numbers<[1], [0], [0], [1], [0, 0, 1, 1], [], []>} : vector<8x288xbf16>, vector<288x128xbf16>, vector<8x128xf32> -> vector<8x128xf32>
    %c1 = arith.constant 1 : index
    %c0_4 = arith.constant 0 : index
    %c0_5 = arith.constant 0 : index
    %4 = vector.load %arg0[%c1, %c0_4, %c0_5] : memref<4x8x288xbf16, #tpu.memory_space<vmem>>, vector<1x8x288xbf16>
    %5 = vector.shape_cast %4 : vector<1x8x288xbf16> to vector<8x288xbf16>
    %c0_6 = arith.constant 0 : index
    %c0_7 = arith.constant 0 : index
    %6 = vector.load %arg1[%c0_6, %c0_7] : memref<288x128xbf16, #tpu.memory_space<vmem>>, vector<288x128xbf16>
    %cst_8 = arith.constant dense<0.000000e+00> : vector<8x128xf32>
    %7 = tpu.matmul %5, %6, %cst_8 {dimension_numbers = #tpu.dot_dimension_numbers<[1], [0], [0], [1], [0, 0, 1, 1], [], []>} : vector<8x288xbf16>, vector<288x128xbf16>, vector<8x128xf32> -> vector<8x128xf32>
    %c2 = arith.constant 2 : index
    %c0_9 = arith.constant 0 : index
    %c0_10 = arith.constant 0 : index
    %8 = vector.load %arg0[%c2, %c0_9, %c0_10] : memref<4x8x288xbf16, #tpu.memory_space<vmem>>, vector<1x8x288xbf16>
    %9 = vector.shape_cast %8 : vector<1x8x288xbf16> to vector<8x288xbf16>
    %c0_11 = arith.constant 0 : index
    %c0_12 = arith.constant 0 : index
    %10 = vector.load %arg1[%c0_11, %c0_12] : memref<288x128xbf16, #tpu.memory_space<vmem>>, vector<288x128xbf16>
    %cst_13 = arith.constant dense<0.000000e+00> : vector<8x128xf32>
    %11 = tpu.matmul %9, %10, %cst_13 {dimension_numbers = #tpu.dot_dimension_numbers<[1], [0], [0], [1], [0, 0, 1, 1], [], []>} : vector<8x288xbf16>, vector<288x128xbf16>, vector<8x128xf32> -> vector<8x128xf32>
    %c3 = arith.constant 3 : index
    %c0_14 = arith.constant 0 : index
    %c0_15 = arith.constant 0 : index
    %12 = vector.load %arg0[%c3, %c0_14, %c0_15] : memref<4x8x288xbf16, #tpu.memory_space<vmem>>, vector<1x8x288xbf16>
    %13 = vector.shape_cast %12 : vector<1x8x288xbf16> to vector<8x288xbf16>
    %c0_16 = arith.constant 0 : index
    %c0_17 = arith.constant 0 : index
    %14 = vector.load %arg1[%c0_16, %c0_17] : memref<288x128xbf16, #tpu.memory_space<vmem>>, vector<288x128xbf16>
    %cst_18 = arith.constant dense<0.000000e+00> : vector<8x128xf32>
    %15 = tpu.matmul %13, %14, %cst_18 {dimension_numbers = #tpu.dot_dimension_numbers<[1], [0], [0], [1], [0, 0, 1, 1], [], []>} : vector<8x288xbf16>, vector<288x128xbf16>, vector<8x128xf32> -> vector<8x128xf32>
    %cst_19 = arith.constant dense<0.000000e+00> : vector<128xf32>
    %16 = vector.multi_reduction <add>, %3, %cst_19 [0] : vector<8x128xf32> to vector<128xf32>
    %17 = vector.shape_cast %16 : vector<128xf32> to vector<1x128xf32>
    %cst_20 = arith.constant dense<0.000000e+00> : vector<128xf32>
    %18 = vector.multi_reduction <add>, %7, %cst_20 [0] : vector<8x128xf32> to vector<128xf32>
    %19 = vector.shape_cast %18 : vector<128xf32> to vector<1x128xf32>
    %cst_21 = arith.constant dense<0.000000e+00> : vector<128xf32>
    %20 = vector.multi_reduction <add>, %11, %cst_21 [0] : vector<8x128xf32> to vector<128xf32>
    %21 = vector.shape_cast %20 : vector<128xf32> to vector<1x128xf32>
    %cst_22 = arith.constant dense<0.000000e+00> : vector<128xf32>
    %22 = vector.multi_reduction <add>, %15, %cst_22 [0] : vector<8x128xf32> to vector<128xf32>
    %23 = vector.shape_cast %22 : vector<128xf32> to vector<1x128xf32>
    %24 = arith.mulf %3, %3 : vector<8x128xf32>
    %cst_23 = arith.constant dense<0.000000e+00> : vector<128xf32>
    %25 = vector.multi_reduction <add>, %24, %cst_23 [0] : vector<8x128xf32> to vector<128xf32>
    %26 = vector.shape_cast %25 : vector<128xf32> to vector<1x128xf32>
    %27 = arith.mulf %7, %7 : vector<8x128xf32>
    %cst_24 = arith.constant dense<0.000000e+00> : vector<128xf32>
    %28 = vector.multi_reduction <add>, %27, %cst_24 [0] : vector<8x128xf32> to vector<128xf32>
    %29 = vector.shape_cast %28 : vector<128xf32> to vector<1x128xf32>
    %30 = arith.mulf %11, %11 : vector<8x128xf32>
    %cst_25 = arith.constant dense<0.000000e+00> : vector<128xf32>
    %31 = vector.multi_reduction <add>, %30, %cst_25 [0] : vector<8x128xf32> to vector<128xf32>
    %32 = vector.shape_cast %31 : vector<128xf32> to vector<1x128xf32>
    %33 = arith.mulf %15, %15 : vector<8x128xf32>
    %cst_26 = arith.constant dense<0.000000e+00> : vector<128xf32>
    %34 = vector.multi_reduction <add>, %33, %cst_26 [0] : vector<8x128xf32> to vector<128xf32>
    %35 = vector.shape_cast %34 : vector<128xf32> to vector<1x128xf32>
    %36 = arith.addf %17, %19 : vector<1x128xf32>
    %37 = arith.addf %36, %21 : vector<1x128xf32>
    %38 = arith.addf %37, %23 : vector<1x128xf32>
    %39 = arith.addf %26, %29 : vector<1x128xf32>
    %40 = arith.addf %39, %32 : vector<1x128xf32>
    %41 = arith.addf %40, %35 : vector<1x128xf32>
    %cst_27 = arith.constant 1.250000e-01 : f32
    %42 = vector.broadcast %cst_27 : f32 to vector<1x128xf32>
    %43 = arith.mulf %38, %42 : vector<1x128xf32>
    %cst_28 = arith.constant 1.250000e-01 : f32
    %44 = vector.broadcast %cst_28 : f32 to vector<1x128xf32>
    %45 = arith.mulf %41, %44 : vector<1x128xf32>
    %46 = arith.mulf %43, %43 : vector<1x128xf32>
    %47 = arith.subf %45, %46 : vector<1x128xf32>
    %cst_29 = arith.constant 0.000000e+00 : f32
    %48 = vector.broadcast %cst_29 : f32 to vector<1x128xf32>
    %49 = arith.maximumf %47, %48 : vector<1x128xf32>
    %c0_30 = arith.constant 0 : index
    %c0_31 = arith.constant 0 : index
    %50 = vector.load %arg2[%c0_30, %c0_31] : memref<2x128xf32, #tpu.memory_space<vmem>>, vector<2x128xf32>
    %51 = vector.extract_strided_slice %50 {offsets = [0, 0], sizes = [1, 128], strides = [1, 1]} : vector<2x128xf32> to vector<1x128xf32>
    %cst_32 = arith.constant 9.99999974E-6 : f32
    %52 = vector.broadcast %cst_32 : f32 to vector<1x128xf32>
    %53 = arith.addf %49, %52 : vector<1x128xf32>
    %54 = math.rsqrt %53 : vector<1x128xf32>
    %55 = arith.mulf %51, %54 : vector<1x128xf32>
    %56 = vector.extract_strided_slice %50 {offsets = [1, 0], sizes = [1, 128], strides = [1, 1]} : vector<2x128xf32> to vector<1x128xf32>
    %57 = arith.mulf %43, %55 : vector<1x128xf32>
    %58 = arith.subf %56, %57 : vector<1x128xf32>
    %59 = vector.broadcast %55 : vector<1x128xf32> to vector<8x128xf32>
    %60 = arith.mulf %3, %59 : vector<8x128xf32>
    %61 = vector.broadcast %58 : vector<1x128xf32> to vector<8x128xf32>
    %62 = arith.addf %60, %61 : vector<8x128xf32>
    %cst_33 = arith.constant 0.000000e+00 : f32
    %63 = vector.broadcast %cst_33 : f32 to vector<8x128xf32>
    %64 = arith.cmpf oge, %62, %63 : vector<8x128xf32>
    %cst_34 = arith.constant 0.00999999977 : f32
    %65 = vector.broadcast %cst_34 : f32 to vector<8x128xf32>
    %66 = arith.mulf %65, %62 : vector<8x128xf32>
    %67 = arith.select %64, %62, %66 : vector<8x128xi1>, vector<8x128xf32>
    %68 = vector.broadcast %55 : vector<1x128xf32> to vector<8x128xf32>
    %69 = arith.mulf %7, %68 : vector<8x128xf32>
    %70 = vector.broadcast %58 : vector<1x128xf32> to vector<8x128xf32>
    %71 = arith.addf %69, %70 : vector<8x128xf32>
    %cst_35 = arith.constant 0.000000e+00 : f32
    %72 = vector.broadcast %cst_35 : f32 to vector<8x128xf32>
    %73 = arith.cmpf oge, %71, %72 : vector<8x128xf32>
    %cst_36 = arith.constant 0.00999999977 : f32
    %74 = vector.broadcast %cst_36 : f32 to vector<8x128xf32>
    %75 = arith.mulf %74, %71 : vector<8x128xf32>
    %76 = arith.select %73, %71, %75 : vector<8x128xi1>, vector<8x128xf32>
    %77 = vector.broadcast %55 : vector<1x128xf32> to vector<8x128xf32>
    %78 = arith.mulf %11, %77 : vector<8x128xf32>
    %79 = vector.broadcast %58 : vector<1x128xf32> to vector<8x128xf32>
    %80 = arith.addf %78, %79 : vector<8x128xf32>
    %cst_37 = arith.constant 0.000000e+00 : f32
    %81 = vector.broadcast %cst_37 : f32 to vector<8x128xf32>
    %82 = arith.cmpf oge, %80, %81 : vector<8x128xf32>
    %cst_38 = arith.constant 0.00999999977 : f32
    %83 = vector.broadcast %cst_38 : f32 to vector<8x128xf32>
    %84 = arith.mulf %83, %80 : vector<8x128xf32>
    %85 = arith.select %82, %80, %84 : vector<8x128xi1>, vector<8x128xf32>
    %86 = vector.broadcast %55 : vector<1x128xf32> to vector<8x128xf32>
    %87 = arith.mulf %15, %86 : vector<8x128xf32>
    %88 = vector.broadcast %58 : vector<1x128xf32> to vector<8x128xf32>
    %89 = arith.addf %87, %88 : vector<8x128xf32>
    %cst_39 = arith.constant 0.000000e+00 : f32
    %90 = vector.broadcast %cst_39 : f32 to vector<8x128xf32>
    %91 = arith.cmpf oge, %89, %90 : vector<8x128xf32>
    %cst_40 = arith.constant 0.00999999977 : f32
    %92 = vector.broadcast %cst_40 : f32 to vector<8x128xf32>
    %93 = arith.mulf %92, %89 : vector<8x128xf32>
    %94 = arith.select %91, %89, %93 : vector<8x128xi1>, vector<8x128xf32>
    %95 = arith.maximumf %67, %76 : vector<8x128xf32>
    %96 = arith.maximumf %85, %94 : vector<8x128xf32>
    %97 = arith.maximumf %95, %96 : vector<8x128xf32>
    %98 = arith.truncf %97 : vector<8x128xf32> to vector<8x128xbf16>
    %c0_41 = arith.constant 0 : index
    %c0_42 = arith.constant 0 : index
    %99 = vector.load %arg3[%c0_41, %c0_42] : memref<128x128xbf16, #tpu.memory_space<vmem>>, vector<128x128xbf16>
    %cst_43 = arith.constant dense<0.000000e+00> : vector<8x128xf32>
    %100 = tpu.matmul %98, %99, %cst_43 {dimension_numbers = #tpu.dot_dimension_numbers<[1], [0], [0], [1], [0, 0, 1, 1], [], []>} : vector<8x128xbf16>, vector<128x128xbf16>, vector<8x128xf32> -> vector<8x128xf32>
    %c0_44 = arith.constant 0 : index
    %c0_45 = arith.constant 0 : index
    %101 = vector.load %arg4[%c0_44, %c0_45] : memref<1x128xf32, #tpu.memory_space<vmem>>, vector<1x128xf32>
    %102 = vector.broadcast %101 : vector<1x128xf32> to vector<8x128xf32>
    %103 = arith.addf %100, %102 : vector<8x128xf32>
    %c0_46 = arith.constant 0 : index
    %c0_47 = arith.constant 0 : index
    %104 = vector.load %arg5[%c0_46, %c0_47] : memref<8x128xf32, #tpu.memory_space<vmem>>, vector<8x128xf32>
    tpu.vector_store %arg5[%c0_46, %c0_47], %103 {strides = array<i32>} : memref<8x128xf32, #tpu.memory_space<vmem>>, vector<8x128xf32>,
    return
  }
}

</mosaic_0001>

<llo_original>
// kernel: gradual_style_block_forward.3
$region0: #{gradual_style_block_forward.3}
  #allocation0 [shape = 'u32[]', space=smem, size = 0x4, offset = 0x4, fixed_abs, tag = 'smem constant byte address 0x4 - core index']
  #allocation1 [shape = 'u32[144,128]{1,0:T(1,128)}', space=vmem, size = 0x12000, scoped, tag = 'internal scratch']
  %s0 = inlined_call_operand.vmem [shape: bf16[128,288], index: 0, kind: input, shape index: {}]
  %s1 = inlined_call_operand.vmem [shape: bf16[288,128], index: 1, kind: input, shape index: {}]
  %s2 = inlined_call_operand.vmem [shape: bf16[128,128], index: 2, kind: output, shape index: {0}]
  %s3 = inlined_call_operand.vmem [shape: f32[2,2,128], index: 3, kind: output, shape index: {1}]
  %4 = xla_tuple %s2, %s3
  %s5 = sld [smem:[#allocation0]]
  $region49: #{gradual_style_block_forward.3} parent=0
    _
  %s7 = ssub.s32 1, %s5
  %s8 = scalar_select 0, %s7, %s5
  loop: start=0, step=1, limit=4
  $region2: #{gradual_style_block_forward.3} parent=0 // loop_pre_header
    _
  $region3: #{gradual_style_block_forward.3} parent=0 // loop_header
    %s10 = sphi 0, %s14
    %p11 = scmp.ge.s32.totalorder %s10, 4
    %s20 = sphi 0, %s22
    %s23 = sphi 0, %s20
    %s24 = sphi 0, %s23
    %s40 = sphi 0, %s24
    %s44 = sphi 0, %s44
    %s46 = sphi 0, %s44
    %s47 = sphi 0, %s46
    %s61 = sphi 0, %s47
    %s67 = sphi 0, %s69
    %s70 = sphi 0, %s67
    %s71 = sphi 0, %s70
    %s87 = sphi 0, %s71
    %s93 = sphi 0, %s95
    %s96 = sphi 0, %s93
    %s97 = sphi 0, %s96
    %s113 = sphi 0, %s97
  $region4: #{gradual_style_block_forward.3} parent=0 // loop_header_branch
    %13 = sbr.rel (%p11) target = $region8
  $region5: #{gradual_style_block_forward.3} parent=0 // loop_body
    %s15 = ssub.s32 %s10, 1
    %s16 = ssub.s32 %s10, 2
    %s17 = sadd.s32 %s10, 1
    %s18 = ssub.s32 %s10, %s17
    %p19 = scmp.eq.s32.totalorder %s18, 0
    %s21 = sadd.s32 %s20, 1
    %s22 = scalar_select %p19, %s20, %s21
    %p25 = pneg %p19
    %p26 = scmp.eq.s32.totalorder %s10, 1
    %p27 = por %p25, %p26
    %p28 = scmp.ne.s32.totalorder %s20, %s23
    %p29 = scmp.eq.s32.totalorder %s10, 0
    %p30 = por %p28, %p29
    %p31 = scmp.ne.s32.totalorder %s20, %s23
    %p32 = scmp.eq.s32.totalorder %s15, 1
    %p33 = por %p31, %p32
    %p34 = scmp.ne.s32.totalorder %s23, %s24
    %p35 = scmp.eq.s32.totalorder %s15, 0
    %p36 = por %p34, %p35
    %p37 = scmp.ne.s32.totalorder %s23, %s24
    %p38 = scmp.eq.s32.totalorder %s16, 1
    %p39 = por %p37, %p38
    %p41 = scmp.ne.s32.totalorder %s24, %s40
    %p42 = scmp.eq.s32.totalorder %s16, 0
    %p43 = por %p41, %p42
    %s45 = sadd.s32 %s44, 1
    %p48 = scmp.eq.s32.totalorder %s10, 1
    %p49 = scmp.ne.s32.totalorder %s44, %s46
    %p50 = scmp.eq.s32.totalorder %s10, 0
    %p51 = por %p49, %p50
    %p52 = scmp.ne.s32.totalorder %s44, %s46
    %p53 = scmp.eq.s32.totalorder %s15, 1
    %p54 = por %p52, %p53
    %p55 = scmp.ne.s32.totalorder %s46, %s47
    %p56 = scmp.eq.s32.totalorder %s15, 0
    %p57 = por %p55, %p56
    %p58 = scmp.ne.s32.totalorder %s46, %s47
    %p59 = scmp.eq.s32.totalorder %s16, 1
    %p60 = por %p58, %p59
    %p62 = scmp.ne.s32.totalorder %s47, %s61
    %p63 = scmp.eq.s32.totalorder %s16, 0
    %p64 = por %p62, %p63
    %s65 = ssub.s32 %s10, %s17
    %p66 = scmp.eq.s32.totalorder %s65, 0
    %s68 = sadd.s32 %s67, 1
    %s69 = scalar_select %p66, %s67, %s68
    %p72 = pneg %p66
    %p73 = scmp.eq.s32.totalorder %s10, 1
    %p74 = por %p72, %p73
    %p75 = scmp.ne.s32.totalorder %s67, %s70
    %p76 = scmp.eq.s32.totalorder %s10, 0
    %p77 = por %p75, %p76
    %p78 = scmp.ne.s32.totalorder %s67, %s70
    %p79 = scmp.eq.s32.totalorder %s15, 1
    %p80 = por %p78, %p79
    %p81 = scmp.ne.s32.totalorder %s70, %s71
    %p82 = scmp.eq.s32.totalorder %s15, 0
    %p83 = por %p81, %p82
    %p84 = scmp.ne.s32.totalorder %s70, %s71
    %p85 = scmp.eq.s32.totalorder %s16, 1
    %p86 = por %p84, %p85
    %p88 = scmp.ne.s32.totalorder %s71, %s87
    %p89 = scmp.eq.s32.totalorder %s16, 0
    %p90 = por %p88, %p89
    %s91 = ssub.s32 %s10, %s17
    %p92 = scmp.eq.s32.totalorder %s91, 0
    %s94 = sadd.s32 %s93, 1
    %s95 = scalar_select %p92, %s93, %s94
    %p98 = pneg %p92
    %p99 = scmp.eq.s32.totalorder %s10, 1
    %p100 = por %p98, %p99
    %p101 = scmp.ne.s32.totalorder %s93, %s96
    %p102 = scmp.eq.s32.totalorder %s10, 0
    %p103 = por %p101, %p102
    %p104 = scmp.ne.s32.totalorder %s93, %s96
    %p105 = scmp.eq.s32.totalorder %s15, 1
    %p106 = por %p104, %p105
    %p107 = scmp.ne.s32.totalorder %s96, %s97
    %p108 = scmp.eq.s32.totalorder %s15, 0
    %p109 = por %p107, %p108
    %p110 = scmp.ne.s32.totalorder %s96, %s97
    %p111 = scmp.eq.s32.totalorder %s16, 1
    %p112 = por %p110, %p111
    %p114 = scmp.ne.s32.totalorder %s97, %s113
    %p115 = scmp.eq.s32.totalorder %s16, 0
    %p116 = por %p114, %p115
    %p117 = scmp.le.s32.totalorder 1, %s10
    %p118 = scmp.lt.s32.totalorder %s10, 3
    %p119 = pnand %p117, %p118
    %p120 = pneg %p119
    // Predicated region
    $region9: #{gradual_style_block_forward.3} parent=5 // pred_check
      _
    $region10: #{gradual_style_block_forward.3} parent=5 // pred_check_branch
      %122 = sbr.rel (%p119) target = $region12
    $region11: #{gradual_style_block_forward.3} parent=5 // pred_region
      %s123 = ssub.s32 %s10, 1
      // Predicated region
      $region13: #{gradual_style_block_forward.3} parent=11 // pred_check
        %p124 = pneg %p57
      $region14: #{gradual_style_block_forward.3} parent=11 // pred_check_branch
        %126 = sbr.rel (%p124) target = $region16
      $region15: #{gradual_style_block_forward.3} parent=11 // pred_region
        _
      $region16: #{gradual_style_block_forward.3} parent=11 // pred_fallthru
        _
    $region12: #{gradual_style_block_forward.3} parent=5 // pred_fallthru
      _
    %p127 = scmp.lt.s32.totalorder %s10, 2
    // Predicated region
    $region17: #{gradual_style_block_forward.3} parent=5 // pred_check
      %p128 = pneg %p127
    $region18: #{gradual_style_block_forward.3} parent=5 // pred_check_branch
      %130 = sbr.rel (%p128) target = $region20
    $region19: #{gradual_style_block_forward.3} parent=5 // pred_region
      // Predicated region
      $region21: #{gradual_style_block_forward.3} parent=19 // pred_check
        %p131 = pneg %p30
      $region22: #{gradual_style_block_forward.3} parent=19 // pred_check_branch
        %133 = sbr.rel (%p131) target = $region24
      $region23: #{gradual_style_block_forward.3} parent=19 // pred_region
        %s134 = smul.u32 8, %s10
        %p135 = scmp.lt.s32.totalorder %s134, 15
        %s136 = scalar_select %p135, %s134, 15
        %s137 = smul.addr %s136, 3
        %s138 = smul.addr %s137, 4
        %s139 = scalar_lea.vmem %s0, %s138
        %s140 = smul.u32 8, %s10
      $region24: #{gradual_style_block_forward.3} parent=19 // pred_fallthru
        _
    $region20: #{gradual_style_block_forward.3} parent=5 // pred_fallthru
      _
    %p141 = scmp.le.s32.totalorder 1, %s10
    %p142 = scmp.lt.s32.totalorder %s10, 3
    %p143 = pnand %p141, %p142
    %p144 = pneg %p143
    // Predicated region
    $region25: #{gradual_style_block_forward.3} parent=5 // pred_check
      _
    $region26: #{gradual_style_block_forward.3} parent=5 // pred_check_branch
      %146 = sbr.rel (%p143) target = $region28
    $region27: #{gradual_style_block_forward.3} parent=5 // pred_region
      %s147 = ssub.s32 %s10, 1
      %s148 = smul.u32 8, %s15
      %p149 = scmp.lt.s32.totalorder %s148, 15
      %s150 = scalar_select %p149, %s148, 15
      %s151 = smul.addr %s150, 3
      %s152 = smul.addr %s151, 4
      %s153 = scalar_lea.vmem %s0, %s152
      %p154 = pneg %p36
      %p155 = pneg %p33
      %p156 = pneg %p57
      %p157 = pneg %p54
      %p158 = pneg %p83
      %p159 = pneg %p80
      %s160 = smul.u32 8, %s15
      %p161 = scmp.lt.s32.totalorder %s160, 15
      %s162 = scalar_select %p161, %s160, 15
      %s163 = smul.addr %s162, 4
      %s164 = scalar_lea.vmem %s2, %s163
      %p165 = pneg %p109
      %p166 = pneg %p106
      %p167 = scmp.lt.s32.totalorder %s15, 1
      %s168 = scalar_select %p167, %s15, 1
      %s169 = smul.addr %s168, 2
      %s170 = scalar_lea.vmem %s3, %s169
      %s171 = smul.u32 8, %s15
      %p172 = scmp.lt.s32.totalorder %s171, 15
      %s173 = scalar_select %p172, %s171, 15
      %s174 = smul.addr %s173, 3
      %s175 = smul.addr %s174, 4
      %s176 = scalar_lea.vmem %s0, %s175
      %s177 = smul.u32 8, %s15
      %s178 = smul.u32 8, %s15
      %p179 = scmp.lt.s32.totalorder %s178, 15
      %s180 = scalar_select %p179, %s178, 15
      %s181 = smul.addr %s180, 4
      %s182 = scalar_lea.vmem %s2, %s181
      %s183 = smul.u32 8, %s15
      %p184 = scmp.lt.s32.totalorder %s15, 1
      %s185 = scalar_select %p184, %s15, 1
      %s186 = smul.addr %s185, 2
      %s187 = scalar_lea.vmem %s3, %s186
      %v189 = vld [vmem:[%s176] sm:$0xff]
      %v190 = vld [vmem:[%s176 + $0x8] sm:$0xf]
      %v191 = vld [vmem:[%s176 + $0xc] sm:$0xff]
      %v192 = vld [vmem:[%s176 + $0x14] sm:$0xf]
      %v193 = vld [vmem:[%s176 + $0x18] sm:$0xff]
      %v194 = vld [vmem:[%s176 + $0x20] sm:$0xf]
      %v195 = vld [vmem:[%s176 + $0x24] sm:$0xff]
      %v196 = vld [vmem:[%s176 + $0x2c] sm:$0xf]
      %v197 = vld [vmem:[%s176 + $0x30] sm:$0xff]
      %v198 = vld [vmem:[%s176 + $0x38] sm:$0xf]
      %v199 = vld [vmem:[%s176 + $0x3c] sm:$0xff]
      %v200 = vld [vmem:[%s176 + $0x44] sm:$0xf]
      %v201 = vld [vmem:[%s176 + $0x48] sm:$0xff]
      %v202 = vld [vmem:[%s176 + $0x50] sm:$0xf]
      %v203 = vld [vmem:[%s176 + $0x54] sm:$0xff]
      %v204 = vld [vmem:[%s176 + $0x5c] sm:$0xf]
      %v205 = vld [vmem:[%s1] sm:$0xf]
      %v206 = vld [vmem:[%s1 + $0x4] sm:$0xf]
      %v207 = vld [vmem:[%s1 + $0x8] sm:$0xf]
      %v208 = vld [vmem:[%s1 + $0xc] sm:$0xf]
      %v209 = vld [vmem:[%s1 + $0x10] sm:$0xf]
      %v210 = vld [vmem:[%s1 + $0x14] sm:$0xf]
      %v211 = vld [vmem:[%s1 + $0x18] sm:$0xf]
      %v212 = vld [vmem:[%s1 + $0x1c] sm:$0xf]
      %v213 = vld [vmem:[%s1 + $0x20] sm:$0xf]
      %v214 = vld [vmem:[%s1 + $0x24] sm:$0xf]
      %v215 = vld [vmem:[%s1 + $0x28] sm:$0xf]
      %v216 = vld [vmem:[%s1 + $0x2c] sm:$0xf]
      %v217 = vld [vmem:[%s1 + $0x30] sm:$0xf]
      %v218 = vld [vmem:[%s1 + $0x34] sm:$0xf]
      %v219 = vld [vmem:[%s1 + $0x38] sm:$0xf]
      %v220 = vld [vmem:[%s1 + $0x3c] sm:$0xf]
      %v221 = vld [vmem:[%s1 + $0x40] sm:$0xf]
      %v222 = vld [vmem:[%s1 + $0x44] sm:$0xf]
      %v223 = vld [vmem:[%s1 + $0x48] sm:$0xf]
      %v224 = vld [vmem:[%s1 + $0x4c] sm:$0xf]
      %v225 = vld [vmem:[%s1 + $0x50] sm:$0xf]
      %v226 = vld [vmem:[%s1 + $0x54] sm:$0xf]
      %v227 = vld [vmem:[%s1 + $0x58] sm:$0xf]
      %v228 = vld [vmem:[%s1 + $0x5c] sm:$0xf]
      %v229 = vld [vmem:[%s1 + $0x60] sm:$0xf]
      %v230 = vld [vmem:[%s1 + $0x64] sm:$0xf]
      %v231 = vld [vmem:[%s1 + $0x68] sm:$0xf]
      %v232 = vld [vmem:[%s1 + $0x6c] sm:$0xf]
      %v233 = vld [vmem:[%s1 + $0x70] sm:$0xf]
      %v234 = vld [vmem:[%s1 + $0x74] sm:$0xf]
      %v235 = vld [vmem:[%s1 + $0x78] sm:$0xf]
      %v236 = vld [vmem:[%s1 + $0x7c] sm:$0xf]
      %v237 = vld [vmem:[%s1 + $0x80] sm:$0xf]
      %v238 = vld [vmem:[%s1 + $0x84] sm:$0xf]
      %v239 = vld [vmem:[%s1 + $0x88] sm:$0xf]
      %v240 = vld [vmem:[%s1 + $0x8c] sm:$0xf]
      %v257 = vunpack.c.l.b16 %v189
      %v258 = vunpack.c.h.b16 %v189
      %v259 = vunpack.c.l.b16 %v190
      %v260 = vunpack.c.l.b16 %v191
      %v261 = vunpack.c.h.b16 %v191
      %v262 = vunpack.c.l.b16 %v192
      %v263 = vunpack.c.l.b16 %v193
      %v264 = vunpack.c.h.b16 %v193
      %v265 = vunpack.c.l.b16 %v194
      %v266 = vunpack.c.l.b16 %v195
      %v267 = vunpack.c.h.b16 %v195
      %v268 = vunpack.c.l.b16 %v196
      %v269 = vunpack.c.l.b16 %v197
      %v270 = vunpack.c.h.b16 %v197
      %v271 = vunpack.c.l.b16 %v198
      %v272 = vunpack.c.l.b16 %v199
      %v273 = vunpack.c.h.b16 %v199
      %v274 = vunpack.c.l.b16 %v200
      %v275 = vunpack.c.l.b16 %v201
      %v276 = vunpack.c.h.b16 %v201
      %v277 = vunpack.c.l.b16 %v202
      %v278 = vunpack.c.l.b16 %v203
      %v279 = vunpack.c.h.b16 %v203
      %v280 = vunpack.c.l.b16 %v204
      %v281 = vpack.c.b16 %v260, %v257
      %v282 = vpack.c.b16 %v261, %v258
      %v283 = vpack.c.b16 %v262, %v259
      %v284 = vpack.c.b16 %v266, %v263
      %v285 = vpack.c.b16 %v267, %v264
      %v286 = vpack.c.b16 %v268, %v265
      %v287 = vpack.c.b16 %v272, %v269
      %v288 = vpack.c.b16 %v273, %v270
      %v289 = vpack.c.b16 %v274, %v271
      %v290 = vpack.c.b16 %v278, %v275
      %v291 = vpack.c.b16 %v279, %v276
      %v292 = vpack.c.b16 %v280, %v277
      %v337 = vunpack.c.l.b16 %v205
      %v338 = vunpack.c.l.b16 %v206
      %v339 = vunpack.c.l.b16 %v207
      %v340 = vunpack.c.l.b16 %v208
      %v341 = vunpack.c.l.b16 %v209
      %v342 = vunpack.c.l.b16 %v210
      %v343 = vunpack.c.l.b16 %v211
      %v344 = vunpack.c.l.b16 %v212
      %v345 = vunpack.c.l.b16 %v213
      %v346 = vunpack.c.l.b16 %v214
      %v347 = vunpack.c.l.b16 %v215
      %v348 = vunpack.c.l.b16 %v216
      %v349 = vunpack.c.l.b16 %v217
      %v350 = vunpack.c.l.b16 %v218
      %v351 = vunpack.c.l.b16 %v219
      %v352 = vunpack.c.l.b16 %v220
      %v353 = vunpack.c.l.b16 %v221
      %v354 = vunpack.c.l.b16 %v222
      %v355 = vunpack.c.l.b16 %v223
      %v356 = vunpack.c.l.b16 %v224
      %v357 = vunpack.c.l.b16 %v225
      %v358 = vunpack.c.l.b16 %v226
      %v359 = vunpack.c.l.b16 %v227
      %v360 = vunpack.c.l.b16 %v228
      %v361 = vunpack.c.l.b16 %v229
      %v362 = vunpack.c.l.b16 %v230
      %v363 = vunpack.c.l.b16 %v231
      %v364 = vunpack.c.l.b16 %v232
      %v365 = vunpack.c.l.b16 %v233
      %v366 = vunpack.c.l.b16 %v234
      %v367 = vunpack.c.l.b16 %v235
      %v368 = vunpack.c.l.b16 %v236
      %v369 = vunpack.c.l.b16 %v237
      %v370 = vunpack.c.l.b16 %v238
      %v371 = vunpack.c.l.b16 %v239
      %v372 = vunpack.c.l.b16 %v240
      %v373 = vpack.c.b16 %v338, %v337
      %v374 = vpack.c.b16 %v340, %v339
      %v375 = vpack.c.b16 %v342, %v341
      %v376 = vpack.c.b16 %v344, %v343
      %v377 = vpack.c.b16 %v346, %v345
      %v378 = vpack.c.b16 %v348, %v347
      %v379 = vpack.c.b16 %v350, %v349
      %v380 = vpack.c.b16 %v352, %v351
      %v381 = vpack.c.b16 %v354, %v353
      %v382 = vpack.c.b16 %v356, %v355
      %v383 = vpack.c.b16 %v358, %v357
      %v384 = vpack.c.b16 %v360, %v359
      %v385 = vpack.c.b16 %v362, %v361
      %v386 = vpack.c.b16 %v364, %v363
      %v387 = vpack.c.b16 %v366, %v365
      %v388 = vpack.c.b16 %v368, %v367
      %v389 = vpack.c.b16 %v370, %v369
      %v390 = vpack.c.b16 %v372, %v371
      %vm409 = vcmask 261120
      %v411 = vsel %vm409, %v283, 0
      %v414 = vsel %vm409, %v286, 0
      %v417 = vsel %vm409, %v289, 0
      %v420 = vsel %vm409, %v292, 0
      %422 = vmatprep.subr.bf16.mxu0 0
      %423 = vmatpush1.bf16.msra.mxu0 %v380
      %424 = vmatprep.subr.bf16.mxu0 0
      %425 = vmatpush1.bf16.msra.mxu0 %v379
      %426 = vmatprep.subr.bf16.mxu0 0
      %427 = vmatpush1.bf16.msra.mxu0 %v378
      %428 = vmatprep.subr.bf16.mxu0 0
      %429 = vmatpush1.bf16.msra.mxu0 %v377
      %430 = vmatprep.subr.bf16.mxu0 0
      %431 = vmatpush1.bf16.msra.mxu0 %v376
      %432 = vmatprep.subr.bf16.mxu0 0
      %433 = vmatpush1.bf16.msra.mxu0 %v375
      %434 = vmatprep.subr.bf16.mxu0 0
      %435 = vmatpush1.bf16.msra.mxu0 %v374
      %436 = vmatprep.subr.bf16.mxu0 0
      %437 = vmatpush1.bf16.msra.mxu0 %v373
      %438 = vmatprep.subr.bf16.mxu0 0
      %439 = vmatpush2.bf16.msra.mxu0 %v388
      %440 = vmatprep.subr.bf16.mxu0 0
      %441 = vmatpush2.bf16.msra.mxu0 %v387
      %442 = vmatprep.subr.bf16.mxu0 0
      %443 = vmatpush2.bf16.msra.mxu0 %v386
      %444 = vmatprep.subr.bf16.mxu0 0
      %445 = vmatpush2.bf16.msra.mxu0 %v385
      %446 = vmatprep.subr.bf16.mxu0 0
      %447 = vmatpush2.bf16.msra.mxu0 %v384
      %448 = vmatprep.subr.bf16.mxu0 0
      %449 = vmatpush2.bf16.msra.mxu0 %v383
      %450 = vmatprep.subr.bf16.mxu0 0
      %451 = vmatpush2.bf16.msra.mxu0 %v382
      %452 = vmatprep.subr.bf16.mxu0 0
      %453 = vmatpush2.bf16.msra.mxu0 %v381
      %454 = vmatprep.mubr.bf16.mxu0 %v282
      %455 = vmatmul.mubr.bf16.gmra.mxu0 %v281
      %v456 = vpop.f32.mrf.mxu0
      %v457 = vadd.f32 0.0, %v456
      %v458 = vpop.f32.mrf.mxu0
      %v459 = vpop.f32.mrf.mxu0
      %v460 = vadd.f32 0.0, %v459
      %v461 = vpop.f32.mrf.mxu0
      %462 = vmatprep.mubr.bf16.mxu0 %v285
      %463 = vmatmul.mubr.bf16.gmra.mxu0 %v284
      %v464 = vpop.f32.mrf.mxu0
      %v465 = vadd.f32 0.0, %v464
      %v466 = vpop.f32.mrf.mxu0
      %v467 = vpop.f32.mrf.mxu0
      %v468 = vadd.f32 0.0, %v467
      %v469 = vpop.f32.mrf.mxu0
      %470 = vmatprep.mubr.bf16.mxu0 %v288
      %471 = vmatmul.mubr.bf16.gmra.mxu0 %v287
      %v472 = vpop.f32.mrf.mxu0
      %v473 = vadd.f32 0.0, %v472
      %v474 = vpop.f32.mrf.mxu0
      %v475 = vpop.f32.mrf.mxu0
      %v476 = vadd.f32 0.0, %v475
      %v477 = vpop.f32.mrf.mxu0
      %478 = vmatprep.mubr.bf16.mxu0 %v291
      %479 = vmatmul.mubr.bf16.gmra.mxu0 %v290
      %v480 = vpop.f32.mrf.mxu0
      %v481 = vadd.f32 0.0, %v480
      %v482 = vpop.f32.mrf.mxu0
      %v483 = vpop.f32.mrf.mxu0
      %v484 = vadd.f32 0.0, %v483
      %v485 = vpop.f32.mrf.mxu0
      %486 = vdwg.mxu0
      %487 = vmatprep.subr.bf16.mxu0 0
      %488 = vmatpush1.bf16.msra.mxu0 0
      %489 = vmatprep.subr.bf16.mxu0 0
      %490 = vmatpush1.bf16.msra.mxu0 0
      %491 = vmatprep.subr.bf16.mxu0 0
      %492 = vmatpush1.bf16.msra.mxu0 0
      %493 = vmatprep.subr.bf16.mxu0 0
      %494 = vmatpush1.bf16.msra.mxu0 0
      %495 = vmatprep.subr.bf16.mxu0 0
      %496 = vmatpush1.bf16.msra.mxu0 0
      %497 = vmatprep.subr.bf16.mxu0 0
      %498 = vmatpush1.bf16.msra.mxu0 0
      %499 = vmatprep.subr.bf16.mxu0 0
      %500 = vmatpush1.bf16.msra.mxu0 %v390
      %501 = vmatprep.subr.bf16.mxu0 0
      %502 = vmatpush1.bf16.msra.mxu0 %v389
      %503 = vmatprep.subr.bf16.mxu0 0
      %504 = vmatpush2.bf16.msra.mxu0 0
      %505 = vmatprep.subr.bf16.mxu0 0
      %506 = vmatpush2.bf16.msra.mxu0 0
      %507 = vmatprep.subr.bf16.mxu0 0
      %508 = vmatpush2.bf16.msra.mxu0 0
      %509 = vmatprep.subr.bf16.mxu0 0
      %510 = vmatpush2.bf16.msra.mxu0 0
      %511 = vmatprep.subr.bf16.mxu0 0
      %512 = vmatpush2.bf16.msra.mxu0 0
      %513 = vmatprep.subr.bf16.mxu0 0
      %514 = vmatpush2.bf16.msra.mxu0 0
      %515 = vmatprep.subr.bf16.mxu0 0
      %516 = vmatpush2.bf16.msra.mxu0 0
      %517 = vmatprep.subr.bf16.mxu0 0
      %518 = vmatpush2.bf16.msra.mxu0 0
      %519 = vmatprep.mubr.bf16.mxu0 0
      %520 = vmatmul.mubr.bf16.gmra.mxu0 %v411
      %v521 = vpop.f32.mrf.mxu0
      %v522 = vadd.f32 %v457, %v521
      %v523 = vpop.f32.mrf.mxu0
      %v524 = vpop.f32.mrf.mxu0
      %v525 = vadd.f32 %v460, %v524
      %v526 = vpop.f32.mrf.mxu0
      %527 = vmatprep.mubr.bf16.mxu0 0
      %528 = vmatmul.mubr.bf16.gmra.mxu0 %v414
      %v529 = vpop.f32.mrf.mxu0
      %v530 = vadd.f32 %v465, %v529
      %v531 = vpop.f32.mrf.mxu0
      %v532 = vpop.f32.mrf.mxu0
      %v533 = vadd.f32 %v468, %v532
      %v534 = vpop.f32.mrf.mxu0
      %535 = vmatprep.mubr.bf16.mxu0 0
      %536 = vmatmul.mubr.bf16.gmra.mxu0 %v417
      %v537 = vpop.f32.mrf.mxu0
      %v538 = vadd.f32 %v473, %v537
      %v539 = vpop.f32.mrf.mxu0
      %v540 = vpop.f32.mrf.mxu0
      %v541 = vadd.f32 %v476, %v540
      %v542 = vpop.f32.mrf.mxu0
      %543 = vmatprep.mubr.bf16.mxu0 0
      %544 = vmatmul.mubr.bf16.gmra.mxu0 %v420
      %v545 = vpop.f32.mrf.mxu0
      %v546 = vadd.f32 %v481, %v545
      %v547 = vpop.f32.mrf.mxu0
      %v548 = vpop.f32.mrf.mxu0
      %v549 = vadd.f32 %v484, %v548
      %v550 = vpop.f32.mrf.mxu0
      %551 = vdwg.mxu0
      %v552 = vpack.c.bf16 %v525, %v522
      %v553 = vpack.c.bf16 %v533, %v530
      %v554 = vpack.c.bf16 %v541, %v538
      %v555 = vpack.c.bf16 %v549, %v546
      %v560 = vunpack.c.l.b16 %v552
      %v561 = vunpack.c.h.b16 %v552
      %v562 = vunpack.c.l.b16 %v553
      %v563 = vunpack.c.h.b16 %v553
      %v564 = vunpack.c.l.b16 %v554
      %v565 = vunpack.c.h.b16 %v554
      %v566 = vunpack.c.l.b16 %v555
      %v567 = vunpack.c.h.b16 %v555
      %v568 = vpack.c.b16 %v560, %v560
      %v569 = vpack.c.b16 %v561, %v561
      %v570 = vpack.c.b16 %v562, %v562
      %v571 = vpack.c.b16 %v563, %v563
      %v572 = vpack.c.b16 %v564, %v564
      %v573 = vpack.c.b16 %v565, %v565
      %v574 = vpack.c.b16 %v566, %v566
      %v575 = vpack.c.b16 %v567, %v567
      %584 = vst [vmem:[%s182] sm:$0xf] %v568
      %585 = vst [vmem:[%s182 + $0x4] sm:$0xf] %v569
      %586 = vst [vmem:[%s182 + $0x8] sm:$0xf] %v570
      %587 = vst [vmem:[%s182 + $0xc] sm:$0xf] %v571
      %588 = vst [vmem:[%s182 + $0x10] sm:$0xf] %v572
      %589 = vst [vmem:[%s182 + $0x14] sm:$0xf] %v573
      %590 = vst [vmem:[%s182 + $0x18] sm:$0xf] %v574
      %591 = vst [vmem:[%s182 + $0x1c] sm:$0xf] %v575
      %v592 = vunpack.c.l.bf16 %v552
      %v593 = vunpack.c.h.bf16 %v552
      %v594 = vunpack.c.l.bf16 %v553
      %v595 = vunpack.c.h.bf16 %v553
      %v596 = vunpack.c.l.bf16 %v554
      %v597 = vunpack.c.h.bf16 %v554
      %v598 = vunpack.c.l.bf16 %v555
      %v599 = vunpack.c.h.bf16 %v555
      %v600 = vadd.f32 %v592, %v593
      %v601 = vadd.f32 %v600, %v594
      %v602 = vadd.f32 %v601, %v595
      %v603 = vadd.f32 %v602, %v596
      %v604 = vadd.f32 %v603, %v597
      %v605 = vadd.f32 %v604, %v598
      %v606 = vadd.f32 %v605, %v599
      %v607 = vrot.slane %v606, 4
      %v608 = vadd.f32 %v606, %v607
      %v609 = vrot.slane %v608, 2
      %v610 = vadd.f32 %v608, %v609
      %v611 = vrot.slane %v610, 1
      %v612 = vadd.f32 %v610, %v611
      %v613 = vmul.f32 %v592, %v592
      %v614 = vmul.f32 %v593, %v593
      %v615 = vmul.f32 %v594, %v594
      %v616 = vmul.f32 %v595, %v595
      %v617 = vmul.f32 %v596, %v596
      %v618 = vmul.f32 %v597, %v597
      %v619 = vmul.f32 %v598, %v598
      %v620 = vmul.f32 %v599, %v599
      %v621 = vadd.f32 %v613, %v614
      %v622 = vadd.f32 %v621, %v615
      %v623 = vadd.f32 %v622, %v616
      %v624 = vadd.f32 %v623, %v617
      %v625 = vadd.f32 %v624, %v618
      %v626 = vadd.f32 %v625, %v619
      %v627 = vadd.f32 %v626, %v620
      %v628 = vrot.slane %v627, 4
      %v629 = vadd.f32 %v627, %v628
      %v630 = vrot.slane %v629, 2
      %v631 = vadd.f32 %v629, %v630
      %v632 = vrot.slane %v631, 1
      %v633 = vadd.f32 %v631, %v632
      %vm634 = vcmask 1040384
      %v635 = vsel %vm634, %v612, %v633
      %636 = vst [vmem:[%s187] sm:$0x3] %v635
      %s637 = smul.u32 8, %s15
      %p638 = scmp.lt.s32.totalorder %s637, 15
      %s639 = scalar_select %p638, %s637, 15
      %s640 = smul.addr %s639, 4
      %s641 = scalar_lea.vmem %s2, %s640
      %p642 = scmp.lt.s32.totalorder %s15, 1
      %s643 = scalar_select %p642, %s15, 1
      %s644 = smul.addr %s643, 2
      %s645 = scalar_lea.vmem %s3, %s644
      // Predicated region
      $region29: #{gradual_style_block_forward.3} parent=27 // pred_check
        %p646 = pneg %p80
      $region30: #{gradual_style_block_forward.3} parent=27 // pred_check_branch
        %648 = sbr.rel (%p646) target = $region32
      $region31: #{gradual_style_block_forward.3} parent=27 // pred_region
        %s649 = smul.u32 8, %s15
      $region32: #{gradual_style_block_forward.3} parent=27 // pred_fallthru
        _
      // Predicated region
      $region33: #{gradual_style_block_forward.3} parent=27 // pred_check
        %p650 = pneg %p106
      $region34: #{gradual_style_block_forward.3} parent=27 // pred_check_branch
        %652 = sbr.rel (%p650) target = $region36
      $region35: #{gradual_style_block_forward.3} parent=27 // pred_region
        _
      $region36: #{gradual_style_block_forward.3} parent=27 // pred_fallthru
        _
    $region28: #{gradual_style_block_forward.3} parent=5 // pred_fallthru
      _
    %p653 = scmp.le.s32.totalorder 2, %s10
    // Predicated region
    $region37: #{gradual_style_block_forward.3} parent=5 // pred_check
      %p654 = pneg %p653
    $region38: #{gradual_style_block_forward.3} parent=5 // pred_check_branch
      %656 = sbr.rel (%p654) target = $region40
    $region39: #{gradual_style_block_forward.3} parent=5 // pred_region
      %s657 = ssub.s32 %s10, 2
      // Predicated region
      $region41: #{gradual_style_block_forward.3} parent=39 // pred_check
        %p658 = pneg %p86
      $region42: #{gradual_style_block_forward.3} parent=39 // pred_check_branch
        %660 = sbr.rel (%p658) target = $region44
      $region43: #{gradual_style_block_forward.3} parent=39 // pred_region
        %s661 = smul.u32 8, %s16
        %p662 = scmp.lt.s32.totalorder %s661, 15
        %s663 = scalar_select %p662, %s661, 15
        %s664 = smul.addr %s663, 4
        %s665 = scalar_lea.vmem %s2, %s664
      $region44: #{gradual_style_block_forward.3} parent=39 // pred_fallthru
        _
      // Predicated region
      $region45: #{gradual_style_block_forward.3} parent=39 // pred_check
        %p666 = pneg %p112
      $region46: #{gradual_style_block_forward.3} parent=39 // pred_check_branch
        %668 = sbr.rel (%p666) target = $region48
      $region47: #{gradual_style_block_forward.3} parent=39 // pred_region
        %p669 = scmp.lt.s32.totalorder %s16, 1
        %s670 = scalar_select %p669, %s16, 1
        %s671 = smul.addr %s670, 2
        %s672 = scalar_lea.vmem %s3, %s671
      $region48: #{gradual_style_block_forward.3} parent=39 // pred_fallthru
        _
    $region40: #{gradual_style_block_forward.3} parent=5 // pred_fallthru
      _
  $region6: #{gradual_style_block_forward.3} parent=0 // loop_footer
    %s14 = sadd.s32 1, %s10
  $region7: #{gradual_style_block_forward.3} parent=0 // loop_footer_branch
    %9 = sbr.rel target = $region3
  $region8: #{gradual_style_block_forward.3} parent=0 // loop_exit
    _

// kernel: gradual_style_block_forward.4
$region0: #{gradual_style_block_forward.4}
  #allocation0 [shape = 'u32[]', space=smem, size = 0x4, offset = 0x4, fixed_abs, tag = 'smem constant byte address 0x4 - core index']
  #allocation1 [shape = 'u32[144,128]{1,0:T(1,128)}', space=vmem, size = 0x12000, scoped, tag = 'internal scratch']
  %s0 = inlined_call_operand.vmem [shape: bf16[32,288], index: 0, kind: input, shape index: {}]
  %s1 = inlined_call_operand.vmem [shape: bf16[288,128], index: 1, kind: input, shape index: {}]
  %s2 = inlined_call_operand.vmem [shape: bf16[32,128], index: 2, kind: output, shape index: {0}]
  %s3 = inlined_call_operand.vmem [shape: f32[1,2,128], index: 3, kind: output, shape index: {1}]
  %4 = xla_tuple %s2, %s3
  %s5 = sld [smem:[#allocation0]]
  $region26: #{gradual_style_block_forward.4} parent=0
    _
  %s7 = ssub.s32 1, %s5
  %s8 = scalar_select 0, %s7, %s5
  // Predicated region
  $region2: #{gradual_style_block_forward.4} parent=0 // pred_check
    _
  $region3: #{gradual_style_block_forward.4} parent=0 // pred_check_branch
    %10 = sbr.rel (0) target = $region5
  $region4: #{gradual_style_block_forward.4} parent=0 // pred_region
    _
  $region5: #{gradual_style_block_forward.4} parent=0 // pred_fallthru
    _
  // Predicated region
  $region6: #{gradual_style_block_forward.4} parent=0 // pred_check
    _
  $region7: #{gradual_style_block_forward.4} parent=0 // pred_check_branch
    %12 = sbr.rel (0) target = $region9
  $region8: #{gradual_style_block_forward.4} parent=0 // pred_region
    _
  $region9: #{gradual_style_block_forward.4} parent=0 // pred_fallthru
    _
  %v14 = vld [vmem:[%s0] sm:$0xff]
  %v15 = vld [vmem:[%s0 + $0x8] sm:$0xf]
  %v16 = vld [vmem:[%s0 + $0xc] sm:$0xff]
  %v17 = vld [vmem:[%s0 + $0x14] sm:$0xf]
  %v18 = vld [vmem:[%s0 + $0x18] sm:$0xff]
  %v19 = vld [vmem:[%s0 + $0x20] sm:$0xf]
  %v20 = vld [vmem:[%s0 + $0x24] sm:$0xff]
  %v21 = vld [vmem:[%s0 + $0x2c] sm:$0xf]
  %v22 = vld [vmem:[%s1] sm:$0xf]
  %v23 = vld [vmem:[%s1 + $0x4] sm:$0xf]
  %v24 = vld [vmem:[%s1 + $0x8] sm:$0xf]
  %v25 = vld [vmem:[%s1 + $0xc] sm:$0xf]
  %v26 = vld [vmem:[%s1 + $0x10] sm:$0xf]
  %v27 = vld [vmem:[%s1 + $0x14] sm:$0xf]
  %v28 = vld [vmem:[%s1 + $0x18] sm:$0xf]
  %v29 = vld [vmem:[%s1 + $0x1c] sm:$0xf]
  %v30 = vld [vmem:[%s1 + $0x20] sm:$0xf]
  %v31 = vld [vmem:[%s1 + $0x24] sm:$0xf]
  %v32 = vld [vmem:[%s1 + $0x28] sm:$0xf]
  %v33 = vld [vmem:[%s1 + $0x2c] sm:$0xf]
  %v34 = vld [vmem:[%s1 + $0x30] sm:$0xf]
  %v35 = vld [vmem:[%s1 + $0x34] sm:$0xf]
  %v36 = vld [vmem:[%s1 + $0x38] sm:$0xf]
  %v37 = vld [vmem:[%s1 + $0x3c] sm:$0xf]
  %v38 = vld [vmem:[%s1 + $0x40] sm:$0xf]
  %v39 = vld [vmem:[%s1 + $0x44] sm:$0xf]
  %v40 = vld [vmem:[%s1 + $0x48] sm:$0xf]
  %v41 = vld [vmem:[%s1 + $0x4c] sm:$0xf]
  %v42 = vld [vmem:[%s1 + $0x50] sm:$0xf]
  %v43 = vld [vmem:[%s1 + $0x54] sm:$0xf]
  %v44 = vld [vmem:[%s1 + $0x58] sm:$0xf]
  %v45 = vld [vmem:[%s1 + $0x5c] sm:$0xf]
  %v46 = vld [vmem:[%s1 + $0x60] sm:$0xf]
  %v47 = vld [vmem:[%s1 + $0x64] sm:$0xf]
  %v48 = vld [vmem:[%s1 + $0x68] sm:$0xf]
  %v49 = vld [vmem:[%s1 + $0x6c] sm:$0xf]
  %v50 = vld [vmem:[%s1 + $0x70] sm:$0xf]
  %v51 = vld [vmem:[%s1 + $0x74] sm:$0xf]
  %v52 = vld [vmem:[%s1 + $0x78] sm:$0xf]
  %v53 = vld [vmem:[%s1 + $0x7c] sm:$0xf]
  %v54 = vld [vmem:[%s1 + $0x80] sm:$0xf]
  %v55 = vld [vmem:[%s1 + $0x84] sm:$0xf]
  %v56 = vld [vmem:[%s1 + $0x88] sm:$0xf]
  %v57 = vld [vmem:[%s1 + $0x8c] sm:$0xf]
  %v66 = vunpack.c.l.b16 %v14
  %v67 = vunpack.c.h.b16 %v14
  %v68 = vunpack.c.l.b16 %v15
  %v69 = vunpack.c.l.b16 %v16
  %v70 = vunpack.c.h.b16 %v16
  %v71 = vunpack.c.l.b16 %v17
  %v72 = vunpack.c.l.b16 %v18
  %v73 = vunpack.c.h.b16 %v18
  %v74 = vunpack.c.l.b16 %v19
  %v75 = vunpack.c.l.b16 %v20
  %v76 = vunpack.c.h.b16 %v20
  %v77 = vunpack.c.l.b16 %v21
  %v78 = vpack.c.b16 %v69, %v66
  %v79 = vpack.c.b16 %v70, %v67
  %v80 = vpack.c.b16 %v71, %v68
  %v81 = vpack.c.b16 %v75, %v72
  %v82 = vpack.c.b16 %v76, %v73
  %v83 = vpack.c.b16 %v77, %v74
  %v124 = vunpack.c.l.b16 %v22
  %v125 = vunpack.c.l.b16 %v23
  %v126 = vunpack.c.l.b16 %v24
  %v127 = vunpack.c.l.b16 %v25
  %v128 = vunpack.c.l.b16 %v26
  %v129 = vunpack.c.l.b16 %v27
  %v130 = vunpack.c.l.b16 %v28
  %v131 = vunpack.c.l.b16 %v29
  %v132 = vunpack.c.l.b16 %v30
  %v133 = vunpack.c.l.b16 %v31
  %v134 = vunpack.c.l.b16 %v32
  %v135 = vunpack.c.l.b16 %v33
  %v136 = vunpack.c.l.b16 %v34
  %v137 = vunpack.c.l.b16 %v35
  %v138 = vunpack.c.l.b16 %v36
  %v139 = vunpack.c.l.b16 %v37
  %v140 = vunpack.c.l.b16 %v38
  %v141 = vunpack.c.l.b16 %v39
  %v142 = vunpack.c.l.b16 %v40
  %v143 = vunpack.c.l.b16 %v41
  %v144 = vunpack.c.l.b16 %v42
  %v145 = vunpack.c.l.b16 %v43
  %v146 = vunpack.c.l.b16 %v44
  %v147 = vunpack.c.l.b16 %v45
  %v148 = vunpack.c.l.b16 %v46
  %v149 = vunpack.c.l.b16 %v47
  %v150 = vunpack.c.l.b16 %v48
  %v151 = vunpack.c.l.b16 %v49
  %v152 = vunpack.c.l.b16 %v50
  %v153 = vunpack.c.l.b16 %v51
  %v154 = vunpack.c.l.b16 %v52
  %v155 = vunpack.c.l.b16 %v53
  %v156 = vunpack.c.l.b16 %v54
  %v157 = vunpack.c.l.b16 %v55
  %v158 = vunpack.c.l.b16 %v56
  %v159 = vunpack.c.l.b16 %v57
  %v160 = vpack.c.b16 %v125, %v124
  %v161 = vpack.c.b16 %v127, %v126
  %v162 = vpack.c.b16 %v129, %v128
  %v163 = vpack.c.b16 %v131, %v130
  %v164 = vpack.c.b16 %v133, %v132
  %v165 = vpack.c.b16 %v135, %v134
  %v166 = vpack.c.b16 %v137, %v136
  %v167 = vpack.c.b16 %v139, %v138
  %v168 = vpack.c.b16 %v141, %v140
  %v169 = vpack.c.b16 %v143, %v142
  %v170 = vpack.c.b16 %v145, %v144
  %v171 = vpack.c.b16 %v147, %v146
  %v172 = vpack.c.b16 %v149, %v148
  %v173 = vpack.c.b16 %v151, %v150
  %v174 = vpack.c.b16 %v153, %v152
  %v175 = vpack.c.b16 %v155, %v154
  %v176 = vpack.c.b16 %v157, %v156
  %v177 = vpack.c.b16 %v159, %v158
  %vm196 = vcmask 261120
  %v198 = vsel %vm196, %v80, 0
  %v201 = vsel %vm196, %v83, 0
  %203 = vmatprep.subr.bf16.mxu0 0
  %204 = vmatpush1.bf16.msra.mxu0 %v167
  %205 = vmatprep.subr.bf16.mxu0 0
  %206 = vmatpush1.bf16.msra.mxu0 %v166
  %207 = vmatprep.subr.bf16.mxu0 0
  %208 = vmatpush1.bf16.msra.mxu0 %v165
  %209 = vmatprep.subr.bf16.mxu0 0
  %210 = vmatpush1.bf16.msra.mxu0 %v164
  %211 = vmatprep.subr.bf16.mxu0 0
  %212 = vmatpush1.bf16.msra.mxu0 %v163
  %213 = vmatprep.subr.bf16.mxu0 0
  %214 = vmatpush1.bf16.msra.mxu0 %v162
  %215 = vmatprep.subr.bf16.mxu0 0
  %216 = vmatpush1.bf16.msra.mxu0 %v161
  %217 = vmatprep.subr.bf16.mxu0 0
  %218 = vmatpush1.bf16.msra.mxu0 %v160
  %219 = vmatprep.subr.bf16.mxu0 0
  %220 = vmatpush2.bf16.msra.mxu0 %v175
  %221 = vmatprep.subr.bf16.mxu0 0
  %222 = vmatpush2.bf16.msra.mxu0 %v174
  %223 = vmatprep.subr.bf16.mxu0 0
  %224 = vmatpush2.bf16.msra.mxu0 %v173
  %225 = vmatprep.subr.bf16.mxu0 0
  %226 = vmatpush2.bf16.msra.mxu0 %v172
  %227 = vmatprep.subr.bf16.mxu0 0
  %228 = vmatpush2.bf16.msra.mxu0 %v171
  %229 = vmatprep.subr.bf16.mxu0 0
  %230 = vmatpush2.bf16.msra.mxu0 %v170
  %231 = vmatprep.subr.bf16.mxu0 0
  %232 = vmatpush2.bf16.msra.mxu0 %v169
  %233 = vmatprep.subr.bf16.mxu0 0
  %234 = vmatpush2.bf16.msra.mxu0 %v168
  %235 = vmatprep.mubr.bf16.mxu0 %v79
  %236 = vmatmul.mubr.bf16.gmra.mxu0 %v78
  %v237 = vpop.f32.mrf.mxu0
  %v238 = vadd.f32 0.0, %v237
  %v239 = vpop.f32.mrf.mxu0
  %v240 = vpop.f32.mrf.mxu0
  %v241 = vadd.f32 0.0, %v240
  %v242 = vpop.f32.mrf.mxu0
  %243 = vmatprep.mubr.bf16.mxu0 %v82
  %244 = vmatmul.mubr.bf16.gmra.mxu0 %v81
  %v245 = vpop.f32.mrf.mxu0
  %v246 = vadd.f32 0.0, %v245
  %v247 = vpop.f32.mrf.mxu0
  %v248 = vpop.f32.mrf.mxu0
  %v249 = vadd.f32 0.0, %v248
  %v250 = vpop.f32.mrf.mxu0
  %251 = vdwg.mxu0
  %252 = vmatprep.subr.bf16.mxu0 0
  %253 = vmatpush1.bf16.msra.mxu0 0
  %254 = vmatprep.subr.bf16.mxu0 0
  %255 = vmatpush1.bf16.msra.mxu0 0
  %256 = vmatprep.subr.bf16.mxu0 0
  %257 = vmatpush1.bf16.msra.mxu0 0
  %258 = vmatprep.subr.bf16.mxu0 0
  %259 = vmatpush1.bf16.msra.mxu0 0
  %260 = vmatprep.subr.bf16.mxu0 0
  %261 = vmatpush1.bf16.msra.mxu0 0
  %262 = vmatprep.subr.bf16.mxu0 0
  %263 = vmatpush1.bf16.msra.mxu0 0
  %264 = vmatprep.subr.bf16.mxu0 0
  %265 = vmatpush1.bf16.msra.mxu0 %v177
  %266 = vmatprep.subr.bf16.mxu0 0
  %267 = vmatpush1.bf16.msra.mxu0 %v176
  %268 = vmatprep.subr.bf16.mxu0 0
  %269 = vmatpush2.bf16.msra.mxu0 0
  %270 = vmatprep.subr.bf16.mxu0 0
  %271 = vmatpush2.bf16.msra.mxu0 0
  %272 = vmatprep.subr.bf16.mxu0 0
  %273 = vmatpush2.bf16.msra.mxu0 0
  %274 = vmatprep.subr.bf16.mxu0 0
  %275 = vmatpush2.bf16.msra.mxu0 0
  %276 = vmatprep.subr.bf16.mxu0 0
  %277 = vmatpush2.bf16.msra.mxu0 0
  %278 = vmatprep.subr.bf16.mxu0 0
  %279 = vmatpush2.bf16.msra.mxu0 0
  %280 = vmatprep.subr.bf16.mxu0 0
  %281 = vmatpush2.bf16.msra.mxu0 0
  %282 = vmatprep.subr.bf16.mxu0 0
  %283 = vmatpush2.bf16.msra.mxu0 0
  %284 = vmatprep.mubr.bf16.mxu0 0
  %285 = vmatmul.mubr.bf16.gmra.mxu0 %v198
  %v286 = vpop.f32.mrf.mxu0
  %v287 = vadd.f32 %v238, %v286
  %v288 = vpop.f32.mrf.mxu0
  %v289 = vpop.f32.mrf.mxu0
  %v290 = vadd.f32 %v241, %v289
  %v291 = vpop.f32.mrf.mxu0
  %292 = vmatprep.mubr.bf16.mxu0 0
  %293 = vmatmul.mubr.bf16.gmra.mxu0 %v201
  %v294 = vpop.f32.mrf.mxu0
  %v295 = vadd.f32 %v246, %v294
  %v296 = vpop.f32.mrf.mxu0
  %v297 = vpop.f32.mrf.mxu0
  %v298 = vadd.f32 %v249, %v297
  %v299 = vpop.f32.mrf.mxu0
  %300 = vdwg.mxu0
  %v301 = vpack.c.bf16 %v290, %v287
  %v302 = vpack.c.bf16 %v298, %v295
  %v305 = vunpack.c.l.b16 %v301
  %v306 = vunpack.c.h.b16 %v301
  %v307 = vunpack.c.l.b16 %v302
  %v308 = vunpack.c.h.b16 %v302
  %v309 = vpack.c.b16 %v305, %v305
  %v310 = vpack.c.b16 %v306, %v306
  %v311 = vpack.c.b16 %v307, %v307
  %v312 = vpack.c.b16 %v308, %v308
  %317 = vst [vmem:[%s2] sm:$0xf] %v309
  %318 = vst [vmem:[%s2 + $0x4] sm:$0xf] %v310
  %319 = vst [vmem:[%s2 + $0x8] sm:$0xf] %v311
  %320 = vst [vmem:[%s2 + $0xc] sm:$0xf] %v312
  %v321 = vunpack.c.l.bf16 %v301
  %v322 = vunpack.c.h.bf16 %v301
  %v323 = vunpack.c.l.bf16 %v302
  %v324 = vunpack.c.h.bf16 %v302
  %v325 = vadd.f32 %v321, %v322
  %v326 = vadd.f32 %v325, %v323
  %v327 = vadd.f32 %v326, %v324
  %v328 = vrot.slane %v327, 4
  %v329 = vadd.f32 %v327, %v328
  %v330 = vrot.slane %v329, 2
  %v331 = vadd.f32 %v329, %v330
  %v332 = vrot.slane %v331, 1
  %v333 = vadd.f32 %v331, %v332
  %v334 = vmul.f32 %v321, %v321
  %v335 = vmul.f32 %v322, %v322
  %v336 = vmul.f32 %v323, %v323
  %v337 = vmul.f32 %v324, %v324
  %v338 = vadd.f32 %v334, %v335
  %v339 = vadd.f32 %v338, %v336
  %v340 = vadd.f32 %v339, %v337
  %v341 = vrot.slane %v340, 4
  %v342 = vadd.f32 %v340, %v341
  %v343 = vrot.slane %v342, 2
  %v344 = vadd.f32 %v342, %v343
  %v345 = vrot.slane %v344, 1
  %v346 = vadd.f32 %v344, %v345
  %vm347 = vcmask 1040384
  %v348 = vsel %vm347, %v333, %v346
  %349 = vst [vmem:[%s3] sm:$0x3] %v348
  // Predicated region
  $region10: #{gradual_style_block_forward.4} parent=0 // pred_check
    _
  $region11: #{gradual_style_block_forward.4} parent=0 // pred_check_branch
    %351 = sbr.rel (0) target = $region13
  $region12: #{gradual_style_block_forward.4} parent=0 // pred_region
    _
  $region13: #{gradual_style_block_forward.4} parent=0 // pred_fallthru
    _
  // Predicated region
  $region14: #{gradual_style_block_forward.4} parent=0 // pred_check
    _
  $region15: #{gradual_style_block_forward.4} parent=0 // pred_check_branch
    %353 = sbr.rel (0) target = $region17
  $region16: #{gradual_style_block_forward.4} parent=0 // pred_region
    _
  $region17: #{gradual_style_block_forward.4} parent=0 // pred_fallthru
    _
  // Predicated region
  $region18: #{gradual_style_block_forward.4} parent=0 // pred_check
    _
  $region19: #{gradual_style_block_forward.4} parent=0 // pred_check_branch
    %355 = sbr.rel (0) target = $region21
  $region20: #{gradual_style_block_forward.4} parent=0 // pred_region
    _
  $region21: #{gradual_style_block_forward.4} parent=0 // pred_fallthru
    _
  // Predicated region
  $region22: #{gradual_style_block_forward.4} parent=0 // pred_check
    _
  $region23: #{gradual_style_block_forward.4} parent=0 // pred_check_branch
    %357 = sbr.rel (0) target = $region25
  $region24: #{gradual_style_block_forward.4} parent=0 // pred_region
    _
  $region25: #{gradual_style_block_forward.4} parent=0 // pred_fallthru
    _

// kernel: gradual_style_block_forward.5
$region0: #{gradual_style_block_forward.5}
  #allocation0 [shape = 'u32[]', space=smem, size = 0x4, offset = 0x4, fixed_abs, tag = 'smem constant byte address 0x4 - core index']
  #allocation1 [shape = 'u32[144,128]{1,0:T(1,128)}', space=vmem, size = 0x12000, scoped, tag = 'internal scratch']
  %s0 = inlined_call_operand.vmem [shape: bf16[4,8,288], index: 0, kind: input, shape index: {}]
  %s1 = inlined_call_operand.vmem [shape: bf16[288,128], index: 1, kind: input, shape index: {}]
  %s2 = inlined_call_operand.vmem [shape: f32[2,128], index: 2, kind: input, shape index: {}]
  %s3 = inlined_call_operand.vmem [shape: bf16[128,128], index: 3, kind: input, shape index: {}]
  %s4 = inlined_call_operand.vmem [shape: f32[1,128], index: 4, kind: input, shape index: {}]
  %s5 = inlined_call_operand.vmem [shape: f32[8,128], index: 5, kind: output, shape index: {}]
  %s6 = sld [smem:[#allocation0]]
  $region30: #{gradual_style_block_forward.5} parent=0
    _
  %s8 = ssub.s32 1, %s6
  %s9 = scalar_select 0, %s8, %s6
  // Predicated region
  $region2: #{gradual_style_block_forward.5} parent=0 // pred_check
    _
  $region3: #{gradual_style_block_forward.5} parent=0 // pred_check_branch
    %11 = sbr.rel (0) target = $region5
  $region4: #{gradual_style_block_forward.5} parent=0 // pred_region
    _
  $region5: #{gradual_style_block_forward.5} parent=0 // pred_fallthru
    _
  // Predicated region
  $region6: #{gradual_style_block_forward.5} parent=0 // pred_check
    _
  $region7: #{gradual_style_block_forward.5} parent=0 // pred_check_branch
    %13 = sbr.rel (0) target = $region9
  $region8: #{gradual_style_block_forward.5} parent=0 // pred_region
    _
  $region9: #{gradual_style_block_forward.5} parent=0 // pred_fallthru
    _
  // Predicated region
  $region10: #{gradual_style_block_forward.5} parent=0 // pred_check
    _
  $region11: #{gradual_style_block_forward.5} parent=0 // pred_check_branch
    %15 = sbr.rel (0) target = $region13
  $region12: #{gradual_style_block_forward.5} parent=0 // pred_region
    _
  $region13: #{gradual_style_block_forward.5} parent=0 // pred_fallthru
    _
  // Predicated region
  $region14: #{gradual_style_block_forward.5} parent=0 // pred_check
    _
  $region15: #{gradual_style_block_forward.5} parent=0 // pred_check_branch
    %17 = sbr.rel (0) target = $region17
  $region16: #{gradual_style_block_forward.5} parent=0 // pred_region
    _
  $region17: #{gradual_style_block_forward.5} parent=0 // pred_fallthru
    _
  // Predicated region
  $region18: #{gradual_style_block_forward.5} parent=0 // pred_check
    _
  $region19: #{gradual_style_block_forward.5} parent=0 // pred_check_branch
    %19 = sbr.rel (0) target = $region21
  $region20: #{gradual_style_block_forward.5} parent=0 // pred_region
    _
  $region21: #{gradual_style_block_forward.5} parent=0 // pred_fallthru
    _
  %v21 = vld [vmem:[%s0] sm:$0xff]
  %v22 = vld [vmem:[%s0 + $0x8] sm:$0xf]
  %v23 = vld [vmem:[%s1] sm:$0xf]
  %v24 = vld [vmem:[%s1 + $0x4] sm:$0xf]
  %v25 = vld [vmem:[%s1 + $0x8] sm:$0xf]
  %v26 = vld [vmem:[%s1 + $0xc] sm:$0xf]
  %v27 = vld [vmem:[%s1 + $0x10] sm:$0xf]
  %v28 = vld [vmem:[%s1 + $0x14] sm:$0xf]
  %v29 = vld [vmem:[%s1 + $0x18] sm:$0xf]
  %v30 = vld [vmem:[%s1 + $0x1c] sm:$0xf]
  %v31 = vld [vmem:[%s1 + $0x20] sm:$0xf]
  %v32 = vld [vmem:[%s1 + $0x24] sm:$0xf]
  %v33 = vld [vmem:[%s1 + $0x28] sm:$0xf]
  %v34 = vld [vmem:[%s1 + $0x2c] sm:$0xf]
  %v35 = vld [vmem:[%s1 + $0x30] sm:$0xf]
  %v36 = vld [vmem:[%s1 + $0x34] sm:$0xf]
  %v37 = vld [vmem:[%s1 + $0x38] sm:$0xf]
  %v38 = vld [vmem:[%s1 + $0x3c] sm:$0xf]
  %v39 = vld [vmem:[%s1 + $0x40] sm:$0xf]
  %v40 = vld [vmem:[%s1 + $0x44] sm:$0xf]
  %v41 = vld [vmem:[%s1 + $0x48] sm:$0xf]
  %v42 = vld [vmem:[%s1 + $0x4c] sm:$0xf]
  %v43 = vld [vmem:[%s1 + $0x50] sm:$0xf]
  %v44 = vld [vmem:[%s1 + $0x54] sm:$0xf]
  %v45 = vld [vmem:[%s1 + $0x58] sm:$0xf]
  %v46 = vld [vmem:[%s1 + $0x5c] sm:$0xf]
  %v47 = vld [vmem:[%s1 + $0x60] sm:$0xf]
  %v48 = vld [vmem:[%s1 + $0x64] sm:$0xf]
  %v49 = vld [vmem:[%s1 + $0x68] sm:$0xf]
  %v50 = vld [vmem:[%s1 + $0x6c] sm:$0xf]
  %v51 = vld [vmem:[%s1 + $0x70] sm:$0xf]
  %v52 = vld [vmem:[%s1 + $0x74] sm:$0xf]
  %v53 = vld [vmem:[%s1 + $0x78] sm:$0xf]
  %v54 = vld [vmem:[%s1 + $0x7c] sm:$0xf]
  %v55 = vld [vmem:[%s1 + $0x80] sm:$0xf]
  %v56 = vld [vmem:[%s1 + $0x84] sm:$0xf]
  %v57 = vld [vmem:[%s1 + $0x88] sm:$0xf]
  %v58 = vld [vmem:[%s1 + $0x8c] sm:$0xf]
  %v61 = vunpack.c.l.b16 %v21
  %v62 = vunpack.c.h.b16 %v21
  %v63 = vunpack.c.l.b16 %v22
  %v64 = vpack.c.b16 %v61, %v61
  %v65 = vpack.c.b16 %v62, %v62
  %v66 = vpack.c.b16 %v63, %v63
  %v105 = vunpack.c.l.b16 %v23
  %v106 = vunpack.c.l.b16 %v24
  %v107 = vunpack.c.l.b16 %v25
  %v108 = vunpack.c.l.b16 %v26
  %v109 = vunpack.c.l.b16 %v27
  %v110 = vunpack.c.l.b16 %v28
  %v111 = vunpack.c.l.b16 %v29
  %v112 = vunpack.c.l.b16 %v30
  %v113 = vunpack.c.l.b16 %v31
  %v114 = vunpack.c.l.b16 %v32
  %v115 = vunpack.c.l.b16 %v33
  %v116 = vunpack.c.l.b16 %v34
  %v117 = vunpack.c.l.b16 %v35
  %v118 = vunpack.c.l.b16 %v36
  %v119 = vunpack.c.l.b16 %v37
  %v120 = vunpack.c.l.b16 %v38
  %v121 = vunpack.c.l.b16 %v39
  %v122 = vunpack.c.l.b16 %v40
  %v123 = vunpack.c.l.b16 %v41
  %v124 = vunpack.c.l.b16 %v42
  %v125 = vunpack.c.l.b16 %v43
  %v126 = vunpack.c.l.b16 %v44
  %v127 = vunpack.c.l.b16 %v45
  %v128 = vunpack.c.l.b16 %v46
  %v129 = vunpack.c.l.b16 %v47
  %v130 = vunpack.c.l.b16 %v48
  %v131 = vunpack.c.l.b16 %v49
  %v132 = vunpack.c.l.b16 %v50
  %v133 = vunpack.c.l.b16 %v51
  %v134 = vunpack.c.l.b16 %v52
  %v135 = vunpack.c.l.b16 %v53
  %v136 = vunpack.c.l.b16 %v54
  %v137 = vunpack.c.l.b16 %v55
  %v138 = vunpack.c.l.b16 %v56
  %v139 = vunpack.c.l.b16 %v57
  %v140 = vunpack.c.l.b16 %v58
  %v141 = vpack.c.b16 %v106, %v105
  %v142 = vpack.c.b16 %v108, %v107
  %v143 = vpack.c.b16 %v110, %v109
  %v144 = vpack.c.b16 %v112, %v111
  %v145 = vpack.c.b16 %v114, %v113
  %v146 = vpack.c.b16 %v116, %v115
  %v147 = vpack.c.b16 %v118, %v117
  %v148 = vpack.c.b16 %v120, %v119
  %v149 = vpack.c.b16 %v122, %v121
  %v150 = vpack.c.b16 %v124, %v123
  %v151 = vpack.c.b16 %v126, %v125
  %v152 = vpack.c.b16 %v128, %v127
  %v153 = vpack.c.b16 %v130, %v129
  %v154 = vpack.c.b16 %v132, %v131
  %v155 = vpack.c.b16 %v134, %v133
  %v156 = vpack.c.b16 %v136, %v135
  %v157 = vpack.c.b16 %v138, %v137
  %v158 = vpack.c.b16 %v140, %v139
  %vm177 = vcmask 261120
  %v179 = vsel %vm177, %v66, 0
  %181 = vmatprep.subr.bf16.mxu0 0
  %182 = vmatpush1.bf16.msra.mxu0 %v148
  %183 = vmatprep.subr.bf16.mxu0 0
  %184 = vmatpush1.bf16.msra.mxu0 %v147
  %185 = vmatprep.subr.bf16.mxu0 0
  %186 = vmatpush1.bf16.msra.mxu0 %v146
  %187 = vmatprep.subr.bf16.mxu0 0
  %188 = vmatpush1.bf16.msra.mxu0 %v145
  %189 = vmatprep.subr.bf16.mxu0 0
  %190 = vmatpush1.bf16.msra.mxu0 %v144
  %191 = vmatprep.subr.bf16.mxu0 0
  %192 = vmatpush1.bf16.msra.mxu0 %v143
  %193 = vmatprep.subr.bf16.mxu0 0
  %194 = vmatpush1.bf16.msra.mxu0 %v142
  %195 = vmatprep.subr.bf16.mxu0 0
  %196 = vmatpush1.bf16.msra.mxu0 %v141
  %197 = vmatprep.subr.bf16.mxu0 0
  %198 = vmatpush2.bf16.msra.mxu0 %v156
  %199 = vmatprep.subr.bf16.mxu0 0
  %200 = vmatpush2.bf16.msra.mxu0 %v155
  %201 = vmatprep.subr.bf16.mxu0 0
  %202 = vmatpush2.bf16.msra.mxu0 %v154
  %203 = vmatprep.subr.bf16.mxu0 0
  %204 = vmatpush2.bf16.msra.mxu0 %v153
  %205 = vmatprep.subr.bf16.mxu0 0
  %206 = vmatpush2.bf16.msra.mxu0 %v152
  %207 = vmatprep.subr.bf16.mxu0 0
  %208 = vmatpush2.bf16.msra.mxu0 %v151
  %209 = vmatprep.subr.bf16.mxu0 0
  %210 = vmatpush2.bf16.msra.mxu0 %v150
  %211 = vmatprep.subr.bf16.mxu0 0
  %212 = vmatpush2.bf16.msra.mxu0 %v149
  %213 = vmatprep.mubr.bf16.mxu0 %v65
  %214 = vmatmul.mubr.bf16.gmra.mxu0 %v64
  %v215 = vpop.f32.mrf.mxu0
  %v216 = vadd.f32 0.0, %v215
  %v217 = vpop.f32.mrf.mxu0
  %v218 = vpop.f32.mrf.mxu0
  %v219 = vpop.f32.mrf.mxu0
  %220 = vdwg.mxu0
  %221 = vmatprep.subr.bf16.mxu0 0
  %222 = vmatpush1.bf16.msra.mxu0 0
  %223 = vmatprep.subr.bf16.mxu0 0
  %224 = vmatpush1.bf16.msra.mxu0 0
  %225 = vmatprep.subr.bf16.mxu0 0
  %226 = vmatpush1.bf16.msra.mxu0 0
  %227 = vmatprep.subr.bf16.mxu0 0
  %228 = vmatpush1.bf16.msra.mxu0 0
  %229 = vmatprep.subr.bf16.mxu0 0
  %230 = vmatpush1.bf16.msra.mxu0 0
  %231 = vmatprep.subr.bf16.mxu0 0
  %232 = vmatpush1.bf16.msra.mxu0 0
  %233 = vmatprep.subr.bf16.mxu0 0
  %234 = vmatpush1.bf16.msra.mxu0 %v158
  %235 = vmatprep.subr.bf16.mxu0 0
  %236 = vmatpush1.bf16.msra.mxu0 %v157
  %237 = vmatprep.subr.bf16.mxu0 0
  %238 = vmatpush2.bf16.msra.mxu0 0
  %239 = vmatprep.subr.bf16.mxu0 0
  %240 = vmatpush2.bf16.msra.mxu0 0
  %241 = vmatprep.subr.bf16.mxu0 0
  %242 = vmatpush2.bf16.msra.mxu0 0
  %243 = vmatprep.subr.bf16.mxu0 0
  %244 = vmatpush2.bf16.msra.mxu0 0
  %245 = vmatprep.subr.bf16.mxu0 0
  %246 = vmatpush2.bf16.msra.mxu0 0
  %247 = vmatprep.subr.bf16.mxu0 0
  %248 = vmatpush2.bf16.msra.mxu0 0
  %249 = vmatprep.subr.bf16.mxu0 0
  %250 = vmatpush2.bf16.msra.mxu0 0
  %251 = vmatprep.subr.bf16.mxu0 0
  %252 = vmatpush2.bf16.msra.mxu0 0
  %253 = vmatprep.mubr.bf16.mxu0 0
  %254 = vmatmul.mubr.bf16.gmra.mxu0 %v179
  %v255 = vpop.f32.mrf.mxu0
  %v256 = vadd.f32 %v216, %v255
  %v257 = vpop.f32.mrf.mxu0
  %v258 = vpop.f32.mrf.mxu0
  %v259 = vpop.f32.mrf.mxu0
  %260 = vdwg.mxu0
  %s261 = scalar_lea.vmem %s0, 12
  %v262 = vld [vmem:[%s261] sm:$0xff]
  %v263 = vld [vmem:[%s261 + $0x8] sm:$0xf]
  %v266 = vunpack.c.l.b16 %v262
  %v267 = vunpack.c.h.b16 %v262
  %v268 = vunpack.c.l.b16 %v263
  %v269 = vpack.c.b16 %v266, %v266
  %v270 = vpack.c.b16 %v267, %v267
  %v271 = vpack.c.b16 %v268, %v268
  %v275 = vsel %vm177, %v271, 0
  %277 = vmatprep.subr.bf16.mxu0 0
  %278 = vmatpush1.bf16.msra.mxu0 %v148
  %279 = vmatprep.subr.bf16.mxu0 0
  %280 = vmatpush1.bf16.msra.mxu0 %v147
  %281 = vmatprep.subr.bf16.mxu0 0
  %282 = vmatpush1.bf16.msra.mxu0 %v146
  %283 = vmatprep.subr.bf16.mxu0 0
  %284 = vmatpush1.bf16.msra.mxu0 %v145
  %285 = vmatprep.subr.bf16.mxu0 0
  %286 = vmatpush1.bf16.msra.mxu0 %v144
  %287 = vmatprep.subr.bf16.mxu0 0
  %288 = vmatpush1.bf16.msra.mxu0 %v143
  %289 = vmatprep.subr.bf16.mxu0 0
  %290 = vmatpush1.bf16.msra.mxu0 %v142
  %291 = vmatprep.subr.bf16.mxu0 0
  %292 = vmatpush1.bf16.msra.mxu0 %v141
  %293 = vmatprep.subr.bf16.mxu0 0
  %294 = vmatpush2.bf16.msra.mxu0 %v156
  %295 = vmatprep.subr.bf16.mxu0 0
  %296 = vmatpush2.bf16.msra.mxu0 %v155
  %297 = vmatprep.subr.bf16.mxu0 0
  %298 = vmatpush2.bf16.msra.mxu0 %v154
  %299 = vmatprep.subr.bf16.mxu0 0
  %300 = vmatpush2.bf16.msra.mxu0 %v153
  %301 = vmatprep.subr.bf16.mxu0 0
  %302 = vmatpush2.bf16.msra.mxu0 %v152
  %303 = vmatprep.subr.bf16.mxu0 0
  %304 = vmatpush2.bf16.msra.mxu0 %v151
  %305 = vmatprep.subr.bf16.mxu0 0
  %306 = vmatpush2.bf16.msra.mxu0 %v150
  %307 = vmatprep.subr.bf16.mxu0 0
  %308 = vmatpush2.bf16.msra.mxu0 %v149
  %309 = vmatprep.mubr.bf16.mxu0 %v270
  %310 = vmatmul.mubr.bf16.gmra.mxu0 %v269
  %v311 = vpop.f32.mrf.mxu0
  %v312 = vadd.f32 0.0, %v311
  %v313 = vpop.f32.mrf.mxu0
  %v314 = vpop.f32.mrf.mxu0
  %v315 = vpop.f32.mrf.mxu0
  %316 = vdwg.mxu0
  %317 = vmatprep.subr.bf16.mxu0 0
  %318 = vmatpush1.bf16.msra.mxu0 0
  %319 = vmatprep.subr.bf16.mxu0 0
  %320 = vmatpush1.bf16.msra.mxu0 0
  %321 = vmatprep.subr.bf16.mxu0 0
  %322 = vmatpush1.bf16.msra.mxu0 0
  %323 = vmatprep.subr.bf16.mxu0 0
  %324 = vmatpush1.bf16.msra.mxu0 0
  %325 = vmatprep.subr.bf16.mxu0 0
  %326 = vmatpush1.bf16.msra.mxu0 0
  %327 = vmatprep.subr.bf16.mxu0 0
  %328 = vmatpush1.bf16.msra.mxu0 0
  %329 = vmatprep.subr.bf16.mxu0 0
  %330 = vmatpush1.bf16.msra.mxu0 %v158
  %331 = vmatprep.subr.bf16.mxu0 0
  %332 = vmatpush1.bf16.msra.mxu0 %v157
  %333 = vmatprep.subr.bf16.mxu0 0
  %334 = vmatpush2.bf16.msra.mxu0 0
  %335 = vmatprep.subr.bf16.mxu0 0
  %336 = vmatpush2.bf16.msra.mxu0 0
  %337 = vmatprep.subr.bf16.mxu0 0
  %338 = vmatpush2.bf16.msra.mxu0 0
  %339 = vmatprep.subr.bf16.mxu0 0
  %340 = vmatpush2.bf16.msra.mxu0 0
  %341 = vmatprep.subr.bf16.mxu0 0
  %342 = vmatpush2.bf16.msra.mxu0 0
  %343 = vmatprep.subr.bf16.mxu0 0
  %344 = vmatpush2.bf16.msra.mxu0 0
  %345 = vmatprep.subr.bf16.mxu0 0
  %346 = vmatpush2.bf16.msra.mxu0 0
  %347 = vmatprep.subr.bf16.mxu0 0
  %348 = vmatpush2.bf16.msra.mxu0 0
  %349 = vmatprep.mubr.bf16.mxu0 0
  %350 = vmatmul.mubr.bf16.gmra.mxu0 %v275
  %v351 = vpop.f32.mrf.mxu0
  %v352 = vadd.f32 %v312, %v351
  %v353 = vpop.f32.mrf.mxu0
  %v354 = vpop.f32.mrf.mxu0
  %v355 = vpop.f32.mrf.mxu0
  %356 = vdwg.mxu0
  %s357 = scalar_lea.vmem %s0, 24
  %v358 = vld [vmem:[%s357] sm:$0xff]
  %v359 = vld [vmem:[%s357 + $0x8] sm:$0xf]
  %v362 = vunpack.c.l.b16 %v358
  %v363 = vunpack.c.h.b16 %v358
  %v364 = vunpack.c.l.b16 %v359
  %v365 = vpack.c.b16 %v362, %v362
  %v366 = vpack.c.b16 %v363, %v363
  %v367 = vpack.c.b16 %v364, %v364
  %v371 = vsel %vm177, %v367, 0
  %373 = vmatprep.subr.bf16.mxu0 0
  %374 = vmatpush1.bf16.msra.mxu0 %v148
  %375 = vmatprep.subr.bf16.mxu0 0
  %376 = vmatpush1.bf16.msra.mxu0 %v147
  %377 = vmatprep.subr.bf16.mxu0 0
  %378 = vmatpush1.bf16.msra.mxu0 %v146
  %379 = vmatprep.subr.bf16.mxu0 0
  %380 = vmatpush1.bf16.msra.mxu0 %v145
  %381 = vmatprep.subr.bf16.mxu0 0
  %382 = vmatpush1.bf16.msra.mxu0 %v144
  %383 = vmatprep.subr.bf16.mxu0 0
  %384 = vmatpush1.bf16.msra.mxu0 %v143
  %385 = vmatprep.subr.bf16.mxu0 0
  %386 = vmatpush1.bf16.msra.mxu0 %v142
  %387 = vmatprep.subr.bf16.mxu0 0
  %388 = vmatpush1.bf16.msra.mxu0 %v141
  %389 = vmatprep.subr.bf16.mxu0 0
  %390 = vmatpush2.bf16.msra.mxu0 %v156
  %391 = vmatprep.subr.bf16.mxu0 0
  %392 = vmatpush2.bf16.msra.mxu0 %v155
  %393 = vmatprep.subr.bf16.mxu0 0
  %394 = vmatpush2.bf16.msra.mxu0 %v154
  %395 = vmatprep.subr.bf16.mxu0 0
  %396 = vmatpush2.bf16.msra.mxu0 %v153
  %397 = vmatprep.subr.bf16.mxu0 0
  %398 = vmatpush2.bf16.msra.mxu0 %v152
  %399 = vmatprep.subr.bf16.mxu0 0
  %400 = vmatpush2.bf16.msra.mxu0 %v151
  %401 = vmatprep.subr.bf16.mxu0 0
  %402 = vmatpush2.bf16.msra.mxu0 %v150
  %403 = vmatprep.subr.bf16.mxu0 0
  %404 = vmatpush2.bf16.msra.mxu0 %v149
  %405 = vmatprep.mubr.bf16.mxu0 %v366
  %406 = vmatmul.mubr.bf16.gmra.mxu0 %v365
  %v407 = vpop.f32.mrf.mxu0
  %v408 = vadd.f32 0.0, %v407
  %v409 = vpop.f32.mrf.mxu0
  %v410 = vpop.f32.mrf.mxu0
  %v411 = vpop.f32.mrf.mxu0
  %412 = vdwg.mxu0
  %413 = vmatprep.subr.bf16.mxu0 0
  %414 = vmatpush1.bf16.msra.mxu0 0
  %415 = vmatprep.subr.bf16.mxu0 0
  %416 = vmatpush1.bf16.msra.mxu0 0
  %417 = vmatprep.subr.bf16.mxu0 0
  %418 = vmatpush1.bf16.msra.mxu0 0
  %419 = vmatprep.subr.bf16.mxu0 0
  %420 = vmatpush1.bf16.msra.mxu0 0
  %421 = vmatprep.subr.bf16.mxu0 0
  %422 = vmatpush1.bf16.msra.mxu0 0
  %423 = vmatprep.subr.bf16.mxu0 0
  %424 = vmatpush1.bf16.msra.mxu0 0
  %425 = vmatprep.subr.bf16.mxu0 0
  %426 = vmatpush1.bf16.msra.mxu0 %v158
  %427 = vmatprep.subr.bf16.mxu0 0
  %428 = vmatpush1.bf16.msra.mxu0 %v157
  %429 = vmatprep.subr.bf16.mxu0 0
  %430 = vmatpush2.bf16.msra.mxu0 0
  %431 = vmatprep.subr.bf16.mxu0 0
  %432 = vmatpush2.bf16.msra.mxu0 0
  %433 = vmatprep.subr.bf16.mxu0 0
  %434 = vmatpush2.bf16.msra.mxu0 0
  %435 = vmatprep.subr.bf16.mxu0 0
  %436 = vmatpush2.bf16.msra.mxu0 0
  %437 = vmatprep.subr.bf16.mxu0 0
  %438 = vmatpush2.bf16.msra.mxu0 0
  %439 = vmatprep.subr.bf16.mxu0 0
  %440 = vmatpush2.bf16.msra.mxu0 0
  %441 = vmatprep.subr.bf16.mxu0 0
  %442 = vmatpush2.bf16.msra.mxu0 0
  %443 = vmatprep.subr.bf16.mxu0 0
  %444 = vmatpush2.bf16.msra.mxu0 0
  %445 = vmatprep.mubr.bf16.mxu0 0
  %446 = vmatmul.mubr.bf16.gmra.mxu0 %v371
  %v447 = vpop.f32.mrf.mxu0
  %v448 = vadd.f32 %v408, %v447
  %v449 = vpop.f32.mrf.mxu0
  %v450 = vpop.f32.mrf.mxu0
  %v451 = vpop.f32.mrf.mxu0
  %452 = vdwg.mxu0
  %s453 = scalar_lea.vmem %s0, 36
  %v454 = vld [vmem:[%s453] sm:$0xff]
  %v455 = vld [vmem:[%s453 + $0x8] sm:$0xf]
  %v458 = vunpack.c.l.b16 %v454
  %v459 = vunpack.c.h.b16 %v454
  %v460 = vunpack.c.l.b16 %v455
  %v461 = vpack.c.b16 %v458, %v458
  %v462 = vpack.c.b16 %v459, %v459
  %v463 = vpack.c.b16 %v460, %v460
  %v467 = vsel %vm177, %v463, 0
  %469 = vmatprep.subr.bf16.mxu0 0
  %470 = vmatpush1.bf16.msra.mxu0 %v148
  %471 = vmatprep.subr.bf16.mxu0 0
  %472 = vmatpush1.bf16.msra.mxu0 %v147
  %473 = vmatprep.subr.bf16.mxu0 0
  %474 = vmatpush1.bf16.msra.mxu0 %v146
  %475 = vmatprep.subr.bf16.mxu0 0
  %476 = vmatpush1.bf16.msra.mxu0 %v145
  %477 = vmatprep.subr.bf16.mxu0 0
  %478 = vmatpush1.bf16.msra.mxu0 %v144
  %479 = vmatprep.subr.bf16.mxu0 0
  %480 = vmatpush1.bf16.msra.mxu0 %v143
  %481 = vmatprep.subr.bf16.mxu0 0
  %482 = vmatpush1.bf16.msra.mxu0 %v142
  %483 = vmatprep.subr.bf16.mxu0 0
  %484 = vmatpush1.bf16.msra.mxu0 %v141
  %485 = vmatprep.subr.bf16.mxu0 0
  %486 = vmatpush2.bf16.msra.mxu0 %v156
  %487 = vmatprep.subr.bf16.mxu0 0
  %488 = vmatpush2.bf16.msra.mxu0 %v155
  %489 = vmatprep.subr.bf16.mxu0 0
  %490 = vmatpush2.bf16.msra.mxu0 %v154
  %491 = vmatprep.subr.bf16.mxu0 0
  %492 = vmatpush2.bf16.msra.mxu0 %v153
  %493 = vmatprep.subr.bf16.mxu0 0
  %494 = vmatpush2.bf16.msra.mxu0 %v152
  %495 = vmatprep.subr.bf16.mxu0 0
  %496 = vmatpush2.bf16.msra.mxu0 %v151
  %497 = vmatprep.subr.bf16.mxu0 0
  %498 = vmatpush2.bf16.msra.mxu0 %v150
  %499 = vmatprep.subr.bf16.mxu0 0
  %500 = vmatpush2.bf16.msra.mxu0 %v149
  %501 = vmatprep.mubr.bf16.mxu0 %v462
  %502 = vmatmul.mubr.bf16.gmra.mxu0 %v461
  %v503 = vpop.f32.mrf.mxu0
  %v504 = vadd.f32 0.0, %v503
  %v505 = vpop.f32.mrf.mxu0
  %v506 = vpop.f32.mrf.mxu0
  %v507 = vpop.f32.mrf.mxu0
  %508 = vdwg.mxu0
  %509 = vmatprep.subr.bf16.mxu0 0
  %510 = vmatpush1.bf16.msra.mxu0 0
  %511 = vmatprep.subr.bf16.mxu0 0
  %512 = vmatpush1.bf16.msra.mxu0 0
  %513 = vmatprep.subr.bf16.mxu0 0
  %514 = vmatpush1.bf16.msra.mxu0 0
  %515 = vmatprep.subr.bf16.mxu0 0
  %516 = vmatpush1.bf16.msra.mxu0 0
  %517 = vmatprep.subr.bf16.mxu0 0
  %518 = vmatpush1.bf16.msra.mxu0 0
  %519 = vmatprep.subr.bf16.mxu0 0
  %520 = vmatpush1.bf16.msra.mxu0 0
  %521 = vmatprep.subr.bf16.mxu0 0
  %522 = vmatpush1.bf16.msra.mxu0 %v158
  %523 = vmatprep.subr.bf16.mxu0 0
  %524 = vmatpush1.bf16.msra.mxu0 %v157
  %525 = vmatprep.subr.bf16.mxu0 0
  %526 = vmatpush2.bf16.msra.mxu0 0
  %527 = vmatprep.subr.bf16.mxu0 0
  %528 = vmatpush2.bf16.msra.mxu0 0
  %529 = vmatprep.subr.bf16.mxu0 0
  %530 = vmatpush2.bf16.msra.mxu0 0
  %531 = vmatprep.subr.bf16.mxu0 0
  %532 = vmatpush2.bf16.msra.mxu0 0
  %533 = vmatprep.subr.bf16.mxu0 0
  %534 = vmatpush2.bf16.msra.mxu0 0
  %535 = vmatprep.subr.bf16.mxu0 0
  %536 = vmatpush2.bf16.msra.mxu0 0
  %537 = vmatprep.subr.bf16.mxu0 0
  %538 = vmatpush2.bf16.msra.mxu0 0
  %539 = vmatprep.subr.bf16.mxu0 0
  %540 = vmatpush2.bf16.msra.mxu0 0
  %541 = vmatprep.mubr.bf16.mxu0 0
  %542 = vmatmul.mubr.bf16.gmra.mxu0 %v467
  %v543 = vpop.f32.mrf.mxu0
  %v544 = vadd.f32 %v504, %v543
  %v545 = vpop.f32.mrf.mxu0
  %v546 = vpop.f32.mrf.mxu0
  %v547 = vpop.f32.mrf.mxu0
  %548 = vdwg.mxu0
  %v549 = vrot.slane %v256, 4
  %v550 = vadd.f32 %v256, %v549
  %v551 = vrot.slane %v550, 2
  %v552 = vadd.f32 %v550, %v551
  %v553 = vrot.slane %v552, 1
  %v554 = vadd.f32 %v552, %v553
  %v555 = vrot.slane %v352, 4
  %v556 = vadd.f32 %v352, %v555
  %v557 = vrot.slane %v556, 2
  %v558 = vadd.f32 %v556, %v557
  %v559 = vrot.slane %v558, 1
  %v560 = vadd.f32 %v558, %v559
  %v561 = vrot.slane %v448, 4
  %v562 = vadd.f32 %v448, %v561
  %v563 = vrot.slane %v562, 2
  %v564 = vadd.f32 %v562, %v563
  %v565 = vrot.slane %v564, 1
  %v566 = vadd.f32 %v564, %v565
  %v567 = vrot.slane %v544, 4
  %v568 = vadd.f32 %v544, %v567
  %v569 = vrot.slane %v568, 2
  %v570 = vadd.f32 %v568, %v569
  %v571 = vrot.slane %v570, 1
  %v572 = vadd.f32 %v570, %v571
  %v573 = vmul.f32 %v256, %v256
  %v574 = vrot.slane %v573, 4
  %v575 = vadd.f32 %v573, %v574
  %v576 = vrot.slane %v575, 2
  %v577 = vadd.f32 %v575, %v576
  %v578 = vrot.slane %v577, 1
  %v579 = vadd.f32 %v577, %v578
  %v580 = vmul.f32 %v352, %v352
  %v581 = vrot.slane %v580, 4
  %v582 = vadd.f32 %v580, %v581
  %v583 = vrot.slane %v582, 2
  %v584 = vadd.f32 %v582, %v583
  %v585 = vrot.slane %v584, 1
  %v586 = vadd.f32 %v584, %v585
  %v587 = vmul.f32 %v448, %v448
  %v588 = vrot.slane %v587, 4
  %v589 = vadd.f32 %v587, %v588
  %v590 = vrot.slane %v589, 2
  %v591 = vadd.f32 %v589, %v590
  %v592 = vrot.slane %v591, 1
  %v593 = vadd.f32 %v591, %v592
  %v594 = vmul.f32 %v544, %v544
  %v595 = vrot.slane %v594, 4
  %v596 = vadd.f32 %v594, %v595
  %v597 = vrot.slane %v596, 2
  %v598 = vadd.f32 %v596, %v597
  %v599 = vrot.slane %v598, 1
  %v600 = vadd.f32 %v598, %v599
  %v601 = vadd.f32 %v554, %v560
  %v602 = vadd.f32 %v601, %v566
  %v603 = vadd.f32 %v602, %v572
  %v604 = vadd.f32 %v579, %v586
  %v605 = vadd.f32 %v604, %v593
  %v606 = vadd.f32 %v605, %v600
  %v607 = vmul.f32 %v603, 0.125
  %v608 = vmul.f32 %v606, 0.125
  %v609 = vmul.f32 %v607, %v607
  %v610 = vsub.f32 %v608, %v609
  %v611 = vmax.f32 %v610, 0.0
  %v612 = vld [vmem:[%s2] sm:$0x3]
  %v613 = vadd.f32 %v611, 1e-05
  %v614 = vrsqrt.pop %v613
  %v615 = vmul.f32 %v612, %v614
  %v616 = vmul.f32 %v607, %v615
  %v618 = vrot.slane %v616, 7
  %v620 = vsub.f32 %v612, %v618
  %v621 = vlaneseq
  %v622 = vshrl.u32 %v621, 7
  %v623 = vsub.s32 0, %v622
  %v624 = vrot.slane %v615, %v623
  %v625 = vmul.f32 %v256, %v624
  %v626 = vlaneseq
  %v627 = vshrl.u32 %v626, 7
  %v628 = vsub.s32 1, %v627
  %v629 = vrot.slane %v620, %v628
  %v630 = vadd.f32 %v625, %v629
  %vm631 = vcmp.ge.f32.partialorder %v630, 0.0
  %v632 = vmul.f32 %v630, 0.01
  %v633 = vsel %vm631, %v630, %v632
  %v634 = vmul.f32 %v352, %v624
  %v635 = vadd.f32 %v634, %v629
  %vm636 = vcmp.ge.f32.partialorder %v635, 0.0
  %v637 = vmul.f32 %v635, 0.01
  %v638 = vsel %vm636, %v635, %v637
  %v639 = vmul.f32 %v448, %v624
  %v640 = vadd.f32 %v639, %v629
  %vm641 = vcmp.ge.f32.partialorder %v640, 0.0
  %v642 = vmul.f32 %v640, 0.01
  %v643 = vsel %vm641, %v640, %v642
  %v644 = vmul.f32 %v544, %v624
  %v645 = vadd.f32 %v644, %v629
  %vm646 = vcmp.ge.f32.partialorder %v645, 0.0
  %v647 = vmul.f32 %v645, 0.01
  %v648 = vsel %vm646, %v645, %v647
  %v649 = vmax.f32 %v633, %v638
  %v650 = vmax.f32 %v643, %v648
  %v651 = vmax.f32 %v649, %v650
  %v652 = vpack.c.bf16 %v651, %v651
  %v653 = vld [vmem:[%s3] sm:$0xf]
  %v654 = vld [vmem:[%s3 + $0x4] sm:$0xf]
  %v655 = vld [vmem:[%s3 + $0x8] sm:$0xf]
  %v656 = vld [vmem:[%s3 + $0xc] sm:$0xf]
  %v657 = vld [vmem:[%s3 + $0x10] sm:$0xf]
  %v658 = vld [vmem:[%s3 + $0x14] sm:$0xf]
  %v659 = vld [vmem:[%s3 + $0x18] sm:$0xf]
  %v660 = vld [vmem:[%s3 + $0x1c] sm:$0xf]
  %v661 = vld [vmem:[%s3 + $0x20] sm:$0xf]
  %v662 = vld [vmem:[%s3 + $0x24] sm:$0xf]
  %v663 = vld [vmem:[%s3 + $0x28] sm:$0xf]
  %v664 = vld [vmem:[%s3 + $0x2c] sm:$0xf]
  %v665 = vld [vmem:[%s3 + $0x30] sm:$0xf]
  %v666 = vld [vmem:[%s3 + $0x34] sm:$0xf]
  %v667 = vld [vmem:[%s3 + $0x38] sm:$0xf]
  %v668 = vld [vmem:[%s3 + $0x3c] sm:$0xf]
  %v669 = vld [vmem:[%s4] sm:$0x1]
  %v671 = vlaneseq
  %v672 = vshrl.u32 %v671, 7
  %v673 = vsub.s32 0, %v672
  %v674 = vrot.slane %v669, %v673
  %v692 = vunpack.c.l.b16 %v653
  %v693 = vunpack.c.l.b16 %v654
  %v694 = vunpack.c.l.b16 %v655
  %v695 = vunpack.c.l.b16 %v656
  %v696 = vunpack.c.l.b16 %v657
  %v697 = vunpack.c.l.b16 %v658
  %v698 = vunpack.c.l.b16 %v659
  %v699 = vunpack.c.l.b16 %v660
  %v700 = vunpack.c.l.b16 %v661
  %v701 = vunpack.c.l.b16 %v662
  %v702 = vunpack.c.l.b16 %v663
  %v703 = vunpack.c.l.b16 %v664
  %v704 = vunpack.c.l.b16 %v665
  %v705 = vunpack.c.l.b16 %v666
  %v706 = vunpack.c.l.b16 %v667
  %v707 = vunpack.c.l.b16 %v668
  %v708 = vpack.c.b16 %v693, %v692
  %v709 = vpack.c.b16 %v695, %v694
  %v710 = vpack.c.b16 %v697, %v696
  %v711 = vpack.c.b16 %v699, %v698
  %v712 = vpack.c.b16 %v701, %v700
  %v713 = vpack.c.b16 %v703, %v702
  %v714 = vpack.c.b16 %v705, %v704
  %v715 = vpack.c.b16 %v707, %v706
  %724 = vmatprep.subr.bf16.mxu0 0
  %725 = vmatpush1.bf16.msra.mxu0 %v715
  %726 = vmatprep.subr.bf16.mxu0 0
  %727 = vmatpush1.bf16.msra.mxu0 %v714
  %728 = vmatprep.subr.bf16.mxu0 0
  %729 = vmatpush1.bf16.msra.mxu0 %v713
  %730 = vmatprep.subr.bf16.mxu0 0
  %731 = vmatpush1.bf16.msra.mxu0 %v712
  %732 = vmatprep.subr.bf16.mxu0 0
  %733 = vmatpush1.bf16.msra.mxu0 %v711
  %734 = vmatprep.subr.bf16.mxu0 0
  %735 = vmatpush1.bf16.msra.mxu0 %v710
  %736 = vmatprep.subr.bf16.mxu0 0
  %737 = vmatpush1.bf16.msra.mxu0 %v709
  %738 = vmatprep.subr.bf16.mxu0 0
  %739 = vmatpush1.bf16.msra.mxu0 %v708
  %740 = vmatprep.subr.bf16.mxu0 0
  %741 = vmatpush2.bf16.msra.mxu0 0
  %742 = vmatprep.subr.bf16.mxu0 0
  %743 = vmatpush2.bf16.msra.mxu0 0
  %744 = vmatprep.subr.bf16.mxu0 0
  %745 = vmatpush2.bf16.msra.mxu0 0
  %746 = vmatprep.subr.bf16.mxu0 0
  %747 = vmatpush2.bf16.msra.mxu0 0
  %748 = vmatprep.subr.bf16.mxu0 0
  %749 = vmatpush2.bf16.msra.mxu0 0
  %750 = vmatprep.subr.bf16.mxu0 0
  %751 = vmatpush2.bf16.msra.mxu0 0
  %752 = vmatprep.subr.bf16.mxu0 0
  %753 = vmatpush2.bf16.msra.mxu0 0
  %754 = vmatprep.subr.bf16.mxu0 0
  %755 = vmatpush2.bf16.msra.mxu0 0
  %756 = vmatprep.mubr.bf16.mxu0 0
  %757 = vmatmul.mubr.bf16.gmra.mxu0 %v652
  %v758 = vpop.f32.mrf.mxu0
  %v759 = vadd.f32 %v674, %v758
  %v760 = vpop.f32.mrf.mxu0
  %v761 = vpop.f32.mrf.mxu0
  %v762 = vpop.f32.mrf.mxu0
  %763 = vdwg.mxu0
  %764 = vst [vmem:[%s5] sm:$0xff] %v759
  // Predicated region
  $region22: #{gradual_style_block_forward.5} parent=0 // pred_check
    _
  $region23: #{gradual_style_block_forward.5} parent=0 // pred_check_branch
    %766 = sbr.rel (0) target = $region25
  $region24: #{gradual_style_block_forward.5} parent=0 // pred_region
    _
  $region25: #{gradual_style_block_forward.5} parent=0 // pred_fallthru
    _
  // Predicated region
  $region26: #{gradual_style_block_forward.5} parent=0 // pred_check
    _
  $region27: #{gradual_style_block_forward.5} parent=0 // pred_check_branch
    %768 = sbr.rel (0) target = $region29
  $region28: #{gradual_style_block_forward.5} parent=0 // pred_region
    _
  $region29: #{gradual_style_block_forward.5} parent=0 // pred_fallthru
    _

</llo_original>
